<compile_context>
chip_gen: v7x
topology: tpu7x:2x2x1
jax: 0.10.0
libtpu: 0.0.40
codegen_flags: <defaults>
</compile_context>

<pallas_src>
import functools

import jax
import jax.numpy as jnp
from jax import lax
from jax.experimental import pallas as pl
from jax.experimental.pallas import tpu as pltpu

# ---------------- small, CIFAR-like configuration ----------------
B = 2            # batch
C = 3            # input channels  (cfg.data.shape = (C, H, W))
H = W = 16       # spatial
S = 8            # cfg.data.S : number of discrete states / bins
FIX_LOGISTIC = True
HW = H * W
D = C * H * W    # flattened pixel dimension per image


def _log_sigmoid(x):
    # numerically-stable logsigmoid, same formulation as torch.F.logsigmoid
    return jnp.minimum(x, 0.0) - jnp.log1p(jnp.exp(-jnp.abs(x)))


def _log_minus_exp(a, b, eps=1e-6):
    # log(exp(a) - exp(b)) for b < a   (https://arxiv.org/pdf/2107.03006.pdf)
    return a + jnp.log1p(-jnp.exp(b - a) + eps)


# ---------------- fused Pallas kernel -----------------------------------------
def _fused_kernel(x_ref, w_ref, beff_ref, o_ref, *, num_states, n_in_ch,
                  n_batch, fix_logistic):
    """Fused surrogate net (1x1 conv + folded time bias) + logistic bin logits.

    x_ref    : (B, C_in, HW)    VMEM f32 -- input image, lane axis = pixels
    w_ref    : (C_in, 2*C_in)   SMEM f32 -- 1x1-conv weights (scalar reads)
    beff_ref : (B, 2*C_in)      SMEM f32 -- bias + time * time_weight (folded)
    o_ref    : (B*C_in, S, HW)  VMEM f32 -- logits, sublane = bin, lane = pixel
    """
    Sq, Cq, HWq = num_states, n_in_ch, x_ref.shape[2]
    bin_width = 2.0 / Sq
    # Bin edges hoisted out of the (b, c) loops.
    # left_edge[i]  = -1 + i*bw      == torch.linspace center_i - bw/2
    # right_edge[i] = -1 + (i+1)*bw  == torch.linspace center_i + bw/2
    idx = lax.broadcasted_iota(jnp.int32, (Sq, 1), 0).astype(jnp.float32)
    left_edge = -1.0 + bin_width * idx           # (S, 1)
    right_edge = left_edge + bin_width           # (S, 1)

    for b in range(n_batch):
        # lane-dense per-channel pixel rows, loaded once and reused for all c
        xrow = [x_ref[b, k:k + 1, :] for k in range(Cq)]       # each (1, HW)
        for c in range(Cq):
            # ---- surrogate 1x1 conv: unrolled VPU FMAs (no MXU) -------------
            mu = jnp.zeros((1, HWq), jnp.float32) + beff_ref[b, c]
            ls = jnp.zeros((1, HWq), jnp.float32) + beff_ref[b, Cq + c]
            for k in range(Cq):
                mu = mu + xrow[k] * w_ref[k, c]
                ls = ls + xrow[k] * w_ref[k, Cq + c]
            inv_scale = jnp.exp(-(ls - 2.0))                   # (1, HW)

            # ---- discretized logistic log-probabilities over S bins ---------
            sig_l = (left_edge - mu) * inv_scale               # (S, HW)
            sig_r = (right_edge - mu) * inv_scale              # (S, HW)
            lcdf_l = _log_sigmoid(sig_l)
            lcdf_r = _log_sigmoid(sig_r)
            logits = _log_minus_exp(lcdf_r, lcdf_l)
            if fix_logistic:
                logits_2 = _log_minus_exp(-sig_l + lcdf_l, -sig_r + lcdf_r)
                logits = jnp.minimum(logits, logits_2)
            o_ref[b * Cq + c] = logits                          # (S, HW) store


# ---------------- ImageX0PredBase.forward ------------------------------------
def image_x0_pred_forward(x_dict, times, params):
    """Returns logits over the state space for each pixel: (B, D, S)."""
    x = x_dict["x"]                                   # (B, D)
    Bq = x.shape[0]
    # x.view(B, C, H, W) with H,W fused -> (B, C, HW); no transpose needed.
    x3 = x.reshape(Bq, C, HW).astype(jnp.float32)
    w = params["w"].astype(jnp.float32)               # (C, 2C)
    # Fold the time embedding into a per-batch effective bias (free in-kernel).
    b_eff = (params["b"].astype(jnp.float32)[None, :]
             + times.astype(jnp.float32)[:, None]
             * params["tw"].astype(jnp.float32)[None, :])       # (B, 2C)

    kernel = functools.partial(_fused_kernel, num_states=S, n_in_ch=C,
                               n_batch=Bq, fix_logistic=FIX_LOGISTIC)
    out = pl.pallas_call(
        kernel,
        out_shape=jax.ShapeDtypeStruct((Bq * C, S, HW), jnp.float32),
        in_specs=[
            pl.BlockSpec(memory_space=pltpu.MemorySpace.VMEM),   # x (B, C, HW)
            pl.BlockSpec(memory_space=pltpu.MemorySpace.SMEM),   # w
            pl.BlockSpec(memory_space=pltpu.MemorySpace.SMEM),   # b_eff
        ],
        out_specs=pl.BlockSpec(memory_space=pltpu.MemorySpace.VMEM),
    )(x3, w, b_eff)

    # (B*C, S, HW) -> (B, C, HW, S) -> (B, D, S): matches NCHW row-major flatten
    return out.reshape(Bq, C, S, HW).transpose(0, 1, 3, 2).reshape(Bq, C * HW, S)


if __name__ == "__main__":
    key = jax.random.PRNGKey(0)
    kx, kt, kw, kb, ktw = jax.random.split(key, 5)

    # deterministic "parameters" for the surrogate net (C -> 2C head)
    params = {
        "w": 0.1 * jax.random.normal(kw, (C, 2 * C), dtype=jnp.float32),
        "b": 0.05 * jax.random.normal(kb, (2 * C,), dtype=jnp.float32),
        "tw": 0.05 * jax.random.normal(ktw, (2 * C,), dtype=jnp.float32),
    }

    # discrete-state image input, flattened to (B, D) as the module expects
    x = jax.random.randint(kx, (B, D), 0, S).astype(jnp.float32)
    times = jax.random.uniform(kt, (B,), dtype=jnp.float32)

    fwd = jax.jit(image_x0_pred_forward)
    logits = fwd({"x": x}, times, params)
    logits = jax.block_until_ready(logits)

    assert logits.shape == (B, D, S), logits.shape
    assert bool(jnp.all(jnp.isfinite(logits)))
    print("KERNEL_OK")
</pallas_src>

<mosaic_0001>
module attributes {stable_mosaic.version = 11 : i64} {
  func.func @_fused_kernel(%arg0: memref<2x3x256xf32, #tpu.memory_space<vmem>>, %arg1: memref<3x6xf32, #tpu.memory_space<smem>>, %arg2: memref<2x6xf32, #tpu.memory_space<smem>>, %arg3: memref<6x8x256xf32, #tpu.memory_space<vmem>>) attributes {dimension_semantics = [], scalar_prefetch = 0 : i64, scratch_operands = 0 : i64, tpu.core_type = #tpu.core_type<tc>} {
    %0 = tpu.iota {dimensions = array<i32: 0>} : vector<8x1xi32>
    %1 = arith.sitofp %0 : vector<8x1xi32> to vector<8x1xf32>
    %cst = arith.constant 2.500000e-01 : f32
    %2 = vector.broadcast %cst : f32 to vector<8x1xf32>
    %3 = arith.mulf %2, %1 : vector<8x1xf32>
    %cst_0 = arith.constant -1.000000e+00 : f32
    %4 = vector.broadcast %cst_0 : f32 to vector<8x1xf32>
    %5 = arith.addf %4, %3 : vector<8x1xf32>
    %cst_1 = arith.constant 2.500000e-01 : f32
    %6 = vector.broadcast %cst_1 : f32 to vector<8x1xf32>
    %7 = arith.addf %5, %6 : vector<8x1xf32>
    %c0 = arith.constant 0 : index
    %c0_2 = arith.constant 0 : index
    %c0_3 = arith.constant 0 : index
    %8 = vector.load %arg0[%c0, %c0_2, %c0_3] : memref<2x3x256xf32, #tpu.memory_space<vmem>>, vector<1x1x256xf32>
    %9 = vector.shape_cast %8 : vector<1x1x256xf32> to vector<1x256xf32>
    %c0_4 = arith.constant 0 : index
    %c1 = arith.constant 1 : index
    %c0_5 = arith.constant 0 : index
    %10 = vector.load %arg0[%c0_4, %c1, %c0_5] : memref<2x3x256xf32, #tpu.memory_space<vmem>>, vector<1x1x256xf32>
    %11 = vector.shape_cast %10 : vector<1x1x256xf32> to vector<1x256xf32>
    %c0_6 = arith.constant 0 : index
    %c2 = arith.constant 2 : index
    %c0_7 = arith.constant 0 : index
    %12 = vector.load %arg0[%c0_6, %c2, %c0_7] : memref<2x3x256xf32, #tpu.memory_space<vmem>>, vector<1x1x256xf32>
    %13 = vector.shape_cast %12 : vector<1x1x256xf32> to vector<1x256xf32>
    %cst_8 = arith.constant 0.000000e+00 : f32
    %14 = vector.broadcast %cst_8 : f32 to vector<1x256xf32>
    %c0_9 = arith.constant 0 : index
    %c0_10 = arith.constant 0 : index
    %15 = memref.load %arg2[%c0_9, %c0_10] : memref<2x6xf32, #tpu.memory_space<smem>>
    %16 = vector.broadcast %15 : f32 to vector<1x256xf32>
    %17 = arith.addf %14, %16 : vector<1x256xf32>
    %cst_11 = arith.constant 0.000000e+00 : f32
    %18 = vector.broadcast %cst_11 : f32 to vector<1x256xf32>
    %c0_12 = arith.constant 0 : index
    %c3 = arith.constant 3 : index
    %19 = memref.load %arg2[%c0_12, %c3] : memref<2x6xf32, #tpu.memory_space<smem>>
    %20 = vector.broadcast %19 : f32 to vector<1x256xf32>
    %21 = arith.addf %18, %20 : vector<1x256xf32>
    %c0_13 = arith.constant 0 : index
    %c0_14 = arith.constant 0 : index
    %22 = memref.load %arg1[%c0_13, %c0_14] : memref<3x6xf32, #tpu.memory_space<smem>>
    %23 = vector.broadcast %22 : f32 to vector<1x256xf32>
    %24 = arith.mulf %9, %23 : vector<1x256xf32>
    %25 = arith.addf %17, %24 : vector<1x256xf32>
    %c0_15 = arith.constant 0 : index
    %c3_16 = arith.constant 3 : index
    %26 = memref.load %arg1[%c0_15, %c3_16] : memref<3x6xf32, #tpu.memory_space<smem>>
    %27 = vector.broadcast %26 : f32 to vector<1x256xf32>
    %28 = arith.mulf %9, %27 : vector<1x256xf32>
    %29 = arith.addf %21, %28 : vector<1x256xf32>
    %c1_17 = arith.constant 1 : index
    %c0_18 = arith.constant 0 : index
    %30 = memref.load %arg1[%c1_17, %c0_18] : memref<3x6xf32, #tpu.memory_space<smem>>
    %31 = vector.broadcast %30 : f32 to vector<1x256xf32>
    %32 = arith.mulf %11, %31 : vector<1x256xf32>
    %33 = arith.addf %25, %32 : vector<1x256xf32>
    %c1_19 = arith.constant 1 : index
    %c3_20 = arith.constant 3 : index
    %34 = memref.load %arg1[%c1_19, %c3_20] : memref<3x6xf32, #tpu.memory_space<smem>>
    %35 = vector.broadcast %34 : f32 to vector<1x256xf32>
    %36 = arith.mulf %11, %35 : vector<1x256xf32>
    %37 = arith.addf %29, %36 : vector<1x256xf32>
    %c2_21 = arith.constant 2 : index
    %c0_22 = arith.constant 0 : index
    %38 = memref.load %arg1[%c2_21, %c0_22] : memref<3x6xf32, #tpu.memory_space<smem>>
    %39 = vector.broadcast %38 : f32 to vector<1x256xf32>
    %40 = arith.mulf %13, %39 : vector<1x256xf32>
    %41 = arith.addf %33, %40 : vector<1x256xf32>
    %c2_23 = arith.constant 2 : index
    %c3_24 = arith.constant 3 : index
    %42 = memref.load %arg1[%c2_23, %c3_24] : memref<3x6xf32, #tpu.memory_space<smem>>
    %43 = vector.broadcast %42 : f32 to vector<1x256xf32>
    %44 = arith.mulf %13, %43 : vector<1x256xf32>
    %45 = arith.addf %37, %44 : vector<1x256xf32>
    %cst_25 = arith.constant 2.000000e+00 : f32
    %46 = vector.broadcast %cst_25 : f32 to vector<1x256xf32>
    %47 = arith.subf %45, %46 : vector<1x256xf32>
    %cst_26 = arith.constant 0.000000e+00 : f32
    %48 = vector.broadcast %cst_26 : f32 to vector<1x256xf32>
    %49 = arith.subf %48, %47 : vector<1x256xf32>
    %50 = math.exp %49 : vector<1x256xf32>
    %51 = vector.broadcast %5 : vector<8x1xf32> to vector<8x256xf32>
    %52 = vector.broadcast %41 : vector<1x256xf32> to vector<8x256xf32>
    %53 = arith.subf %51, %52 : vector<8x256xf32>
    %54 = vector.broadcast %50 : vector<1x256xf32> to vector<8x256xf32>
    %55 = arith.mulf %53, %54 : vector<8x256xf32>
    %56 = vector.broadcast %7 : vector<8x1xf32> to vector<8x256xf32>
    %57 = vector.broadcast %41 : vector<1x256xf32> to vector<8x256xf32>
    %58 = arith.subf %56, %57 : vector<8x256xf32>
    %59 = vector.broadcast %50 : vector<1x256xf32> to vector<8x256xf32>
    %60 = arith.mulf %58, %59 : vector<8x256xf32>
    %cst_27 = arith.constant 0.000000e+00 : f32
    %61 = vector.broadcast %cst_27 : f32 to vector<8x256xf32>
    %62 = arith.minimumf %55, %61 : vector<8x256xf32>
    %63 = math.absf %55 : vector<8x256xf32>
    %cst_28 = arith.constant 0.000000e+00 : f32
    %64 = vector.broadcast %cst_28 : f32 to vector<8x256xf32>
    %65 = arith.subf %64, %63 : vector<8x256xf32>
    %66 = math.exp %65 : vector<8x256xf32>
    %67 = math.log1p %66 : vector<8x256xf32>
    %68 = arith.subf %62, %67 : vector<8x256xf32>
    %cst_29 = arith.constant 0.000000e+00 : f32
    %69 = vector.broadcast %cst_29 : f32 to vector<8x256xf32>
    %70 = arith.minimumf %60, %69 : vector<8x256xf32>
    %71 = math.absf %60 : vector<8x256xf32>
    %cst_30 = arith.constant 0.000000e+00 : f32
    %72 = vector.broadcast %cst_30 : f32 to vector<8x256xf32>
    %73 = arith.subf %72, %71 : vector<8x256xf32>
    %74 = math.exp %73 : vector<8x256xf32>
    %75 = math.log1p %74 : vector<8x256xf32>
    %76 = arith.subf %70, %75 : vector<8x256xf32>
    %77 = arith.subf %68, %76 : vector<8x256xf32>
    %78 = math.exp %77 : vector<8x256xf32>
    %cst_31 = arith.constant 0.000000e+00 : f32
    %79 = vector.broadcast %cst_31 : f32 to vector<8x256xf32>
    %80 = arith.subf %79, %78 : vector<8x256xf32>
    %cst_32 = arith.constant 9.99999997E-7 : f32
    %81 = vector.broadcast %cst_32 : f32 to vector<8x256xf32>
    %82 = arith.addf %80, %81 : vector<8x256xf32>
    %83 = math.log1p %82 : vector<8x256xf32>
    %84 = arith.addf %76, %83 : vector<8x256xf32>
    %cst_33 = arith.constant 0.000000e+00 : f32
    %85 = vector.broadcast %cst_33 : f32 to vector<8x256xf32>
    %86 = arith.subf %85, %55 : vector<8x256xf32>
    %87 = arith.addf %86, %68 : vector<8x256xf32>
    %cst_34 = arith.constant 0.000000e+00 : f32
    %88 = vector.broadcast %cst_34 : f32 to vector<8x256xf32>
    %89 = arith.subf %88, %60 : vector<8x256xf32>
    %90 = arith.addf %89, %76 : vector<8x256xf32>
    %91 = arith.subf %90, %87 : vector<8x256xf32>
    %92 = math.exp %91 : vector<8x256xf32>
    %cst_35 = arith.constant 0.000000e+00 : f32
    %93 = vector.broadcast %cst_35 : f32 to vector<8x256xf32>
    %94 = arith.subf %93, %92 : vector<8x256xf32>
    %cst_36 = arith.constant 9.99999997E-7 : f32
    %95 = vector.broadcast %cst_36 : f32 to vector<8x256xf32>
    %96 = arith.addf %94, %95 : vector<8x256xf32>
    %97 = math.log1p %96 : vector<8x256xf32>
    %98 = arith.addf %87, %97 : vector<8x256xf32>
    %99 = arith.minimumf %84, %98 : vector<8x256xf32>
    %c0_37 = arith.constant 0 : index
    %c0_38 = arith.constant 0 : index
    %c0_39 = arith.constant 0 : index
    %100 = vector.load %arg3[%c0_37, %c0_38, %c0_39] : memref<6x8x256xf32, #tpu.memory_space<vmem>>, vector<1x8x256xf32>
    %101 = vector.shape_cast %100 : vector<1x8x256xf32> to vector<8x256xf32>
    %102 = vector.shape_cast %99 : vector<8x256xf32> to vector<1x8x256xf32>
    tpu.vector_store %arg3[%c0_37, %c0_38, %c0_39], %102 {strides = array<i32>} : memref<6x8x256xf32, #tpu.memory_space<vmem>>, vector<1x8x256xf32>,
    %cst_40 = arith.constant 0.000000e+00 : f32
    %103 = vector.broadcast %cst_40 : f32 to vector<1x256xf32>
    %c0_41 = arith.constant 0 : index
    %c1_42 = arith.constant 1 : index
    %104 = memref.load %arg2[%c0_41, %c1_42] : memref<2x6xf32, #tpu.memory_space<smem>>
    %105 = vector.broadcast %104 : f32 to vector<1x256xf32>
    %106 = arith.addf %103, %105 : vector<1x256xf32>
    %cst_43 = arith.constant 0.000000e+00 : f32
    %107 = vector.broadcast %cst_43 : f32 to vector<1x256xf32>
    %c0_44 = arith.constant 0 : index
    %c4 = arith.constant 4 : index
    %108 = memref.load %arg2[%c0_44, %c4] : memref<2x6xf32, #tpu.memory_space<smem>>
    %109 = vector.broadcast %108 : f32 to vector<1x256xf32>
    %110 = arith.addf %107, %109 : vector<1x256xf32>
    %c0_45 = arith.constant 0 : index
    %c1_46 = arith.constant 1 : index
    %111 = memref.load %arg1[%c0_45, %c1_46] : memref<3x6xf32, #tpu.memory_space<smem>>
    %112 = vector.broadcast %111 : f32 to vector<1x256xf32>
    %113 = arith.mulf %9, %112 : vector<1x256xf32>
    %114 = arith.addf %106, %113 : vector<1x256xf32>
    %c0_47 = arith.constant 0 : index
    %c4_48 = arith.constant 4 : index
    %115 = memref.load %arg1[%c0_47, %c4_48] : memref<3x6xf32, #tpu.memory_space<smem>>
    %116 = vector.broadcast %115 : f32 to vector<1x256xf32>
    %117 = arith.mulf %9, %116 : vector<1x256xf32>
    %118 = arith.addf %110, %117 : vector<1x256xf32>
    %c1_49 = arith.constant 1 : index
    %c1_50 = arith.constant 1 : index
    %119 = memref.load %arg1[%c1_49, %c1_50] : memref<3x6xf32, #tpu.memory_space<smem>>
    %120 = vector.broadcast %119 : f32 to vector<1x256xf32>
    %121 = arith.mulf %11, %120 : vector<1x256xf32>
    %122 = arith.addf %114, %121 : vector<1x256xf32>
    %c1_51 = arith.constant 1 : index
    %c4_52 = arith.constant 4 : index
    %123 = memref.load %arg1[%c1_51, %c4_52] : memref<3x6xf32, #tpu.memory_space<smem>>
    %124 = vector.broadcast %123 : f32 to vector<1x256xf32>
    %125 = arith.mulf %11, %124 : vector<1x256xf32>
    %126 = arith.addf %118, %125 : vector<1x256xf32>
    %c2_53 = arith.constant 2 : index
    %c1_54 = arith.constant 1 : index
    %127 = memref.load %arg1[%c2_53, %c1_54] : memref<3x6xf32, #tpu.memory_space<smem>>
    %128 = vector.broadcast %127 : f32 to vector<1x256xf32>
    %129 = arith.mulf %13, %128 : vector<1x256xf32>
    %130 = arith.addf %122, %129 : vector<1x256xf32>
    %c2_55 = arith.constant 2 : index
    %c4_56 = arith.constant 4 : index
    %131 = memref.load %arg1[%c2_55, %c4_56] : memref<3x6xf32, #tpu.memory_space<smem>>
    %132 = vector.broadcast %131 : f32 to vector<1x256xf32>
    %133 = arith.mulf %13, %132 : vector<1x256xf32>
    %134 = arith.addf %126, %133 : vector<1x256xf32>
    %cst_57 = arith.constant 2.000000e+00 : f32
    %135 = vector.broadcast %cst_57 : f32 to vector<1x256xf32>
    %136 = arith.subf %134, %135 : vector<1x256xf32>
    %cst_58 = arith.constant 0.000000e+00 : f32
    %137 = vector.broadcast %cst_58 : f32 to vector<1x256xf32>
    %138 = arith.subf %137, %136 : vector<1x256xf32>
    %139 = math.exp %138 : vector<1x256xf32>
    %140 = vector.broadcast %5 : vector<8x1xf32> to vector<8x256xf32>
    %141 = vector.broadcast %130 : vector<1x256xf32> to vector<8x256xf32>
    %142 = arith.subf %140, %141 : vector<8x256xf32>
    %143 = vector.broadcast %139 : vector<1x256xf32> to vector<8x256xf32>
    %144 = arith.mulf %142, %143 : vector<8x256xf32>
    %145 = vector.broadcast %7 : vector<8x1xf32> to vector<8x256xf32>
    %146 = vector.broadcast %130 : vector<1x256xf32> to vector<8x256xf32>
    %147 = arith.subf %145, %146 : vector<8x256xf32>
    %148 = vector.broadcast %139 : vector<1x256xf32> to vector<8x256xf32>
    %149 = arith.mulf %147, %148 : vector<8x256xf32>
    %cst_59 = arith.constant 0.000000e+00 : f32
    %150 = vector.broadcast %cst_59 : f32 to vector<8x256xf32>
    %151 = arith.minimumf %144, %150 : vector<8x256xf32>
    %152 = math.absf %144 : vector<8x256xf32>
    %cst_60 = arith.constant 0.000000e+00 : f32
    %153 = vector.broadcast %cst_60 : f32 to vector<8x256xf32>
    %154 = arith.subf %153, %152 : vector<8x256xf32>
    %155 = math.exp %154 : vector<8x256xf32>
    %156 = math.log1p %155 : vector<8x256xf32>
    %157 = arith.subf %151, %156 : vector<8x256xf32>
    %cst_61 = arith.constant 0.000000e+00 : f32
    %158 = vector.broadcast %cst_61 : f32 to vector<8x256xf32>
    %159 = arith.minimumf %149, %158 : vector<8x256xf32>
    %160 = math.absf %149 : vector<8x256xf32>
    %cst_62 = arith.constant 0.000000e+00 : f32
    %161 = vector.broadcast %cst_62 : f32 to vector<8x256xf32>
    %162 = arith.subf %161, %160 : vector<8x256xf32>
    %163 = math.exp %162 : vector<8x256xf32>
    %164 = math.log1p %163 : vector<8x256xf32>
    %165 = arith.subf %159, %164 : vector<8x256xf32>
    %166 = arith.subf %157, %165 : vector<8x256xf32>
    %167 = math.exp %166 : vector<8x256xf32>
    %cst_63 = arith.constant 0.000000e+00 : f32
    %168 = vector.broadcast %cst_63 : f32 to vector<8x256xf32>
    %169 = arith.subf %168, %167 : vector<8x256xf32>
    %cst_64 = arith.constant 9.99999997E-7 : f32
    %170 = vector.broadcast %cst_64 : f32 to vector<8x256xf32>
    %171 = arith.addf %169, %170 : vector<8x256xf32>
    %172 = math.log1p %171 : vector<8x256xf32>
    %173 = arith.addf %165, %172 : vector<8x256xf32>
    %cst_65 = arith.constant 0.000000e+00 : f32
    %174 = vector.broadcast %cst_65 : f32 to vector<8x256xf32>
    %175 = arith.subf %174, %144 : vector<8x256xf32>
    %176 = arith.addf %175, %157 : vector<8x256xf32>
    %cst_66 = arith.constant 0.000000e+00 : f32
    %177 = vector.broadcast %cst_66 : f32 to vector<8x256xf32>
    %178 = arith.subf %177, %149 : vector<8x256xf32>
    %179 = arith.addf %178, %165 : vector<8x256xf32>
    %180 = arith.subf %179, %176 : vector<8x256xf32>
    %181 = math.exp %180 : vector<8x256xf32>
    %cst_67 = arith.constant 0.000000e+00 : f32
    %182 = vector.broadcast %cst_67 : f32 to vector<8x256xf32>
    %183 = arith.subf %182, %181 : vector<8x256xf32>
    %cst_68 = arith.constant 9.99999997E-7 : f32
    %184 = vector.broadcast %cst_68 : f32 to vector<8x256xf32>
    %185 = arith.addf %183, %184 : vector<8x256xf32>
    %186 = math.log1p %185 : vector<8x256xf32>
    %187 = arith.addf %176, %186 : vector<8x256xf32>
    %188 = arith.minimumf %173, %187 : vector<8x256xf32>
    %c1_69 = arith.constant 1 : index
    %c0_70 = arith.constant 0 : index
    %c0_71 = arith.constant 0 : index
    %189 = vector.load %arg3[%c1_69, %c0_70, %c0_71] : memref<6x8x256xf32, #tpu.memory_space<vmem>>, vector<1x8x256xf32>
    %190 = vector.shape_cast %189 : vector<1x8x256xf32> to vector<8x256xf32>
    %191 = vector.shape_cast %188 : vector<8x256xf32> to vector<1x8x256xf32>
    tpu.vector_store %arg3[%c1_69, %c0_70, %c0_71], %191 {strides = array<i32>} : memref<6x8x256xf32, #tpu.memory_space<vmem>>, vector<1x8x256xf32>,
    %cst_72 = arith.constant 0.000000e+00 : f32
    %192 = vector.broadcast %cst_72 : f32 to vector<1x256xf32>
    %c0_73 = arith.constant 0 : index
    %c2_74 = arith.constant 2 : index
    %193 = memref.load %arg2[%c0_73, %c2_74] : memref<2x6xf32, #tpu.memory_space<smem>>
    %194 = vector.broadcast %193 : f32 to vector<1x256xf32>
    %195 = arith.addf %192, %194 : vector<1x256xf32>
    %cst_75 = arith.constant 0.000000e+00 : f32
    %196 = vector.broadcast %cst_75 : f32 to vector<1x256xf32>
    %c0_76 = arith.constant 0 : index
    %c5 = arith.constant 5 : index
    %197 = memref.load %arg2[%c0_76, %c5] : memref<2x6xf32, #tpu.memory_space<smem>>
    %198 = vector.broadcast %197 : f32 to vector<1x256xf32>
    %199 = arith.addf %196, %198 : vector<1x256xf32>
    %c0_77 = arith.constant 0 : index
    %c2_78 = arith.constant 2 : index
    %200 = memref.load %arg1[%c0_77, %c2_78] : memref<3x6xf32, #tpu.memory_space<smem>>
    %201 = vector.broadcast %200 : f32 to vector<1x256xf32>
    %202 = arith.mulf %9, %201 : vector<1x256xf32>
    %203 = arith.addf %195, %202 : vector<1x256xf32>
    %c0_79 = arith.constant 0 : index
    %c5_80 = arith.constant 5 : index
    %204 = memref.load %arg1[%c0_79, %c5_80] : memref<3x6xf32, #tpu.memory_space<smem>>
    %205 = vector.broadcast %204 : f32 to vector<1x256xf32>
    %206 = arith.mulf %9, %205 : vector<1x256xf32>
    %207 = arith.addf %199, %206 : vector<1x256xf32>
    %c1_81 = arith.constant 1 : index
    %c2_82 = arith.constant 2 : index
    %208 = memref.load %arg1[%c1_81, %c2_82] : memref<3x6xf32, #tpu.memory_space<smem>>
    %209 = vector.broadcast %208 : f32 to vector<1x256xf32>
    %210 = arith.mulf %11, %209 : vector<1x256xf32>
    %211 = arith.addf %203, %210 : vector<1x256xf32>
    %c1_83 = arith.constant 1 : index
    %c5_84 = arith.constant 5 : index
    %212 = memref.load %arg1[%c1_83, %c5_84] : memref<3x6xf32, #tpu.memory_space<smem>>
    %213 = vector.broadcast %212 : f32 to vector<1x256xf32>
    %214 = arith.mulf %11, %213 : vector<1x256xf32>
    %215 = arith.addf %207, %214 : vector<1x256xf32>
    %c2_85 = arith.constant 2 : index
    %c2_86 = arith.constant 2 : index
    %216 = memref.load %arg1[%c2_85, %c2_86] : memref<3x6xf32, #tpu.memory_space<smem>>
    %217 = vector.broadcast %216 : f32 to vector<1x256xf32>
    %218 = arith.mulf %13, %217 : vector<1x256xf32>
    %219 = arith.addf %211, %218 : vector<1x256xf32>
    %c2_87 = arith.constant 2 : index
    %c5_88 = arith.constant 5 : index
    %220 = memref.load %arg1[%c2_87, %c5_88] : memref<3x6xf32, #tpu.memory_space<smem>>
    %221 = vector.broadcast %220 : f32 to vector<1x256xf32>
    %222 = arith.mulf %13, %221 : vector<1x256xf32>
    %223 = arith.addf %215, %222 : vector<1x256xf32>
    %cst_89 = arith.constant 2.000000e+00 : f32
    %224 = vector.broadcast %cst_89 : f32 to vector<1x256xf32>
    %225 = arith.subf %223, %224 : vector<1x256xf32>
    %cst_90 = arith.constant 0.000000e+00 : f32
    %226 = vector.broadcast %cst_90 : f32 to vector<1x256xf32>
    %227 = arith.subf %226, %225 : vector<1x256xf32>
    %228 = math.exp %227 : vector<1x256xf32>
    %229 = vector.broadcast %5 : vector<8x1xf32> to vector<8x256xf32>
    %230 = vector.broadcast %219 : vector<1x256xf32> to vector<8x256xf32>
    %231 = arith.subf %229, %230 : vector<8x256xf32>
    %232 = vector.broadcast %228 : vector<1x256xf32> to vector<8x256xf32>
    %233 = arith.mulf %231, %232 : vector<8x256xf32>
    %234 = vector.broadcast %7 : vector<8x1xf32> to vector<8x256xf32>
    %235 = vector.broadcast %219 : vector<1x256xf32> to vector<8x256xf32>
    %236 = arith.subf %234, %235 : vector<8x256xf32>
    %237 = vector.broadcast %228 : vector<1x256xf32> to vector<8x256xf32>
    %238 = arith.mulf %236, %237 : vector<8x256xf32>
    %cst_91 = arith.constant 0.000000e+00 : f32
    %239 = vector.broadcast %cst_91 : f32 to vector<8x256xf32>
    %240 = arith.minimumf %233, %239 : vector<8x256xf32>
    %241 = math.absf %233 : vector<8x256xf32>
    %cst_92 = arith.constant 0.000000e+00 : f32
    %242 = vector.broadcast %cst_92 : f32 to vector<8x256xf32>
    %243 = arith.subf %242, %241 : vector<8x256xf32>
    %244 = math.exp %243 : vector<8x256xf32>
    %245 = math.log1p %244 : vector<8x256xf32>
    %246 = arith.subf %240, %245 : vector<8x256xf32>
    %cst_93 = arith.constant 0.000000e+00 : f32
    %247 = vector.broadcast %cst_93 : f32 to vector<8x256xf32>
    %248 = arith.minimumf %238, %247 : vector<8x256xf32>
    %249 = math.absf %238 : vector<8x256xf32>
    %cst_94 = arith.constant 0.000000e+00 : f32
    %250 = vector.broadcast %cst_94 : f32 to vector<8x256xf32>
    %251 = arith.subf %250, %249 : vector<8x256xf32>
    %252 = math.exp %251 : vector<8x256xf32>
    %253 = math.log1p %252 : vector<8x256xf32>
    %254 = arith.subf %248, %253 : vector<8x256xf32>
    %255 = arith.subf %246, %254 : vector<8x256xf32>
    %256 = math.exp %255 : vector<8x256xf32>
    %cst_95 = arith.constant 0.000000e+00 : f32
    %257 = vector.broadcast %cst_95 : f32 to vector<8x256xf32>
    %258 = arith.subf %257, %256 : vector<8x256xf32>
    %cst_96 = arith.constant 9.99999997E-7 : f32
    %259 = vector.broadcast %cst_96 : f32 to vector<8x256xf32>
    %260 = arith.addf %258, %259 : vector<8x256xf32>
    %261 = math.log1p %260 : vector<8x256xf32>
    %262 = arith.addf %254, %261 : vector<8x256xf32>
    %cst_97 = arith.constant 0.000000e+00 : f32
    %263 = vector.broadcast %cst_97 : f32 to vector<8x256xf32>
    %264 = arith.subf %263, %233 : vector<8x256xf32>
    %265 = arith.addf %264, %246 : vector<8x256xf32>
    %cst_98 = arith.constant 0.000000e+00 : f32
    %266 = vector.broadcast %cst_98 : f32 to vector<8x256xf32>
    %267 = arith.subf %266, %238 : vector<8x256xf32>
    %268 = arith.addf %267, %254 : vector<8x256xf32>
    %269 = arith.subf %268, %265 : vector<8x256xf32>
    %270 = math.exp %269 : vector<8x256xf32>
    %cst_99 = arith.constant 0.000000e+00 : f32
    %271 = vector.broadcast %cst_99 : f32 to vector<8x256xf32>
    %272 = arith.subf %271, %270 : vector<8x256xf32>
    %cst_100 = arith.constant 9.99999997E-7 : f32
    %273 = vector.broadcast %cst_100 : f32 to vector<8x256xf32>
    %274 = arith.addf %272, %273 : vector<8x256xf32>
    %275 = math.log1p %274 : vector<8x256xf32>
    %276 = arith.addf %265, %275 : vector<8x256xf32>
    %277 = arith.minimumf %262, %276 : vector<8x256xf32>
    %c2_101 = arith.constant 2 : index
    %c0_102 = arith.constant 0 : index
    %c0_103 = arith.constant 0 : index
    %278 = vector.load %arg3[%c2_101, %c0_102, %c0_103] : memref<6x8x256xf32, #tpu.memory_space<vmem>>, vector<1x8x256xf32>
    %279 = vector.shape_cast %278 : vector<1x8x256xf32> to vector<8x256xf32>
    %280 = vector.shape_cast %277 : vector<8x256xf32> to vector<1x8x256xf32>
    tpu.vector_store %arg3[%c2_101, %c0_102, %c0_103], %280 {strides = array<i32>} : memref<6x8x256xf32, #tpu.memory_space<vmem>>, vector<1x8x256xf32>,
    %c1_104 = arith.constant 1 : index
    %c0_105 = arith.constant 0 : index
    %c0_106 = arith.constant 0 : index
    %281 = vector.load %arg0[%c1_104, %c0_105, %c0_106] : memref<2x3x256xf32, #tpu.memory_space<vmem>>, vector<1x1x256xf32>
    %282 = vector.shape_cast %281 : vector<1x1x256xf32> to vector<1x256xf32>
    %c1_107 = arith.constant 1 : index
    %c1_108 = arith.constant 1 : index
    %c0_109 = arith.constant 0 : index
    %283 = vector.load %arg0[%c1_107, %c1_108, %c0_109] : memref<2x3x256xf32, #tpu.memory_space<vmem>>, vector<1x1x256xf32>
    %284 = vector.shape_cast %283 : vector<1x1x256xf32> to vector<1x256xf32>
    %c1_110 = arith.constant 1 : index
    %c2_111 = arith.constant 2 : index
    %c0_112 = arith.constant 0 : index
    %285 = vector.load %arg0[%c1_110, %c2_111, %c0_112] : memref<2x3x256xf32, #tpu.memory_space<vmem>>, vector<1x1x256xf32>
    %286 = vector.shape_cast %285 : vector<1x1x256xf32> to vector<1x256xf32>
    %cst_113 = arith.constant 0.000000e+00 : f32
    %287 = vector.broadcast %cst_113 : f32 to vector<1x256xf32>
    %c1_114 = arith.constant 1 : index
    %c0_115 = arith.constant 0 : index
    %288 = memref.load %arg2[%c1_114, %c0_115] : memref<2x6xf32, #tpu.memory_space<smem>>
    %289 = vector.broadcast %288 : f32 to vector<1x256xf32>
    %290 = arith.addf %287, %289 : vector<1x256xf32>
    %cst_116 = arith.constant 0.000000e+00 : f32
    %291 = vector.broadcast %cst_116 : f32 to vector<1x256xf32>
    %c1_117 = arith.constant 1 : index
    %c3_118 = arith.constant 3 : index
    %292 = memref.load %arg2[%c1_117, %c3_118] : memref<2x6xf32, #tpu.memory_space<smem>>
    %293 = vector.broadcast %292 : f32 to vector<1x256xf32>
    %294 = arith.addf %291, %293 : vector<1x256xf32>
    %c0_119 = arith.constant 0 : index
    %c0_120 = arith.constant 0 : index
    %295 = memref.load %arg1[%c0_119, %c0_120] : memref<3x6xf32, #tpu.memory_space<smem>>
    %296 = vector.broadcast %295 : f32 to vector<1x256xf32>
    %297 = arith.mulf %282, %296 : vector<1x256xf32>
    %298 = arith.addf %290, %297 : vector<1x256xf32>
    %c0_121 = arith.constant 0 : index
    %c3_122 = arith.constant 3 : index
    %299 = memref.load %arg1[%c0_121, %c3_122] : memref<3x6xf32, #tpu.memory_space<smem>>
    %300 = vector.broadcast %299 : f32 to vector<1x256xf32>
    %301 = arith.mulf %282, %300 : vector<1x256xf32>
    %302 = arith.addf %294, %301 : vector<1x256xf32>
    %c1_123 = arith.constant 1 : index
    %c0_124 = arith.constant 0 : index
    %303 = memref.load %arg1[%c1_123, %c0_124] : memref<3x6xf32, #tpu.memory_space<smem>>
    %304 = vector.broadcast %303 : f32 to vector<1x256xf32>
    %305 = arith.mulf %284, %304 : vector<1x256xf32>
    %306 = arith.addf %298, %305 : vector<1x256xf32>
    %c1_125 = arith.constant 1 : index
    %c3_126 = arith.constant 3 : index
    %307 = memref.load %arg1[%c1_125, %c3_126] : memref<3x6xf32, #tpu.memory_space<smem>>
    %308 = vector.broadcast %307 : f32 to vector<1x256xf32>
    %309 = arith.mulf %284, %308 : vector<1x256xf32>
    %310 = arith.addf %302, %309 : vector<1x256xf32>
    %c2_127 = arith.constant 2 : index
    %c0_128 = arith.constant 0 : index
    %311 = memref.load %arg1[%c2_127, %c0_128] : memref<3x6xf32, #tpu.memory_space<smem>>
    %312 = vector.broadcast %311 : f32 to vector<1x256xf32>
    %313 = arith.mulf %286, %312 : vector<1x256xf32>
    %314 = arith.addf %306, %313 : vector<1x256xf32>
    %c2_129 = arith.constant 2 : index
    %c3_130 = arith.constant 3 : index
    %315 = memref.load %arg1[%c2_129, %c3_130] : memref<3x6xf32, #tpu.memory_space<smem>>
    %316 = vector.broadcast %315 : f32 to vector<1x256xf32>
    %317 = arith.mulf %286, %316 : vector<1x256xf32>
    %318 = arith.addf %310, %317 : vector<1x256xf32>
    %cst_131 = arith.constant 2.000000e+00 : f32
    %319 = vector.broadcast %cst_131 : f32 to vector<1x256xf32>
    %320 = arith.subf %318, %319 : vector<1x256xf32>
    %cst_132 = arith.constant 0.000000e+00 : f32
    %321 = vector.broadcast %cst_132 : f32 to vector<1x256xf32>
    %322 = arith.subf %321, %320 : vector<1x256xf32>
    %323 = math.exp %322 : vector<1x256xf32>
    %324 = vector.broadcast %5 : vector<8x1xf32> to vector<8x256xf32>
    %325 = vector.broadcast %314 : vector<1x256xf32> to vector<8x256xf32>
    %326 = arith.subf %324, %325 : vector<8x256xf32>
    %327 = vector.broadcast %323 : vector<1x256xf32> to vector<8x256xf32>
    %328 = arith.mulf %326, %327 : vector<8x256xf32>
    %329 = vector.broadcast %7 : vector<8x1xf32> to vector<8x256xf32>
    %330 = vector.broadcast %314 : vector<1x256xf32> to vector<8x256xf32>
    %331 = arith.subf %329, %330 : vector<8x256xf32>
    %332 = vector.broadcast %323 : vector<1x256xf32> to vector<8x256xf32>
    %333 = arith.mulf %331, %332 : vector<8x256xf32>
    %cst_133 = arith.constant 0.000000e+00 : f32
    %334 = vector.broadcast %cst_133 : f32 to vector<8x256xf32>
    %335 = arith.minimumf %328, %334 : vector<8x256xf32>
    %336 = math.absf %328 : vector<8x256xf32>
    %cst_134 = arith.constant 0.000000e+00 : f32
    %337 = vector.broadcast %cst_134 : f32 to vector<8x256xf32>
    %338 = arith.subf %337, %336 : vector<8x256xf32>
    %339 = math.exp %338 : vector<8x256xf32>
    %340 = math.log1p %339 : vector<8x256xf32>
    %341 = arith.subf %335, %340 : vector<8x256xf32>
    %cst_135 = arith.constant 0.000000e+00 : f32
    %342 = vector.broadcast %cst_135 : f32 to vector<8x256xf32>
    %343 = arith.minimumf %333, %342 : vector<8x256xf32>
    %344 = math.absf %333 : vector<8x256xf32>
    %cst_136 = arith.constant 0.000000e+00 : f32
    %345 = vector.broadcast %cst_136 : f32 to vector<8x256xf32>
    %346 = arith.subf %345, %344 : vector<8x256xf32>
    %347 = math.exp %346 : vector<8x256xf32>
    %348 = math.log1p %347 : vector<8x256xf32>
    %349 = arith.subf %343, %348 : vector<8x256xf32>
    %350 = arith.subf %341, %349 : vector<8x256xf32>
    %351 = math.exp %350 : vector<8x256xf32>
    %cst_137 = arith.constant 0.000000e+00 : f32
    %352 = vector.broadcast %cst_137 : f32 to vector<8x256xf32>
    %353 = arith.subf %352, %351 : vector<8x256xf32>
    %cst_138 = arith.constant 9.99999997E-7 : f32
    %354 = vector.broadcast %cst_138 : f32 to vector<8x256xf32>
    %355 = arith.addf %353, %354 : vector<8x256xf32>
    %356 = math.log1p %355 : vector<8x256xf32>
    %357 = arith.addf %349, %356 : vector<8x256xf32>
    %cst_139 = arith.constant 0.000000e+00 : f32
    %358 = vector.broadcast %cst_139 : f32 to vector<8x256xf32>
    %359 = arith.subf %358, %328 : vector<8x256xf32>
    %360 = arith.addf %359, %341 : vector<8x256xf32>
    %cst_140 = arith.constant 0.000000e+00 : f32
    %361 = vector.broadcast %cst_140 : f32 to vector<8x256xf32>
    %362 = arith.subf %361, %333 : vector<8x256xf32>
    %363 = arith.addf %362, %349 : vector<8x256xf32>
    %364 = arith.subf %363, %360 : vector<8x256xf32>
    %365 = math.exp %364 : vector<8x256xf32>
    %cst_141 = arith.constant 0.000000e+00 : f32
    %366 = vector.broadcast %cst_141 : f32 to vector<8x256xf32>
    %367 = arith.subf %366, %365 : vector<8x256xf32>
    %cst_142 = arith.constant 9.99999997E-7 : f32
    %368 = vector.broadcast %cst_142 : f32 to vector<8x256xf32>
    %369 = arith.addf %367, %368 : vector<8x256xf32>
    %370 = math.log1p %369 : vector<8x256xf32>
    %371 = arith.addf %360, %370 : vector<8x256xf32>
    %372 = arith.minimumf %357, %371 : vector<8x256xf32>
    %c3_143 = arith.constant 3 : index
    %c0_144 = arith.constant 0 : index
    %c0_145 = arith.constant 0 : index
    %373 = vector.load %arg3[%c3_143, %c0_144, %c0_145] : memref<6x8x256xf32, #tpu.memory_space<vmem>>, vector<1x8x256xf32>
    %374 = vector.shape_cast %373 : vector<1x8x256xf32> to vector<8x256xf32>
    %375 = vector.shape_cast %372 : vector<8x256xf32> to vector<1x8x256xf32>
    tpu.vector_store %arg3[%c3_143, %c0_144, %c0_145], %375 {strides = array<i32>} : memref<6x8x256xf32, #tpu.memory_space<vmem>>, vector<1x8x256xf32>,
    %cst_146 = arith.constant 0.000000e+00 : f32
    %376 = vector.broadcast %cst_146 : f32 to vector<1x256xf32>
    %c1_147 = arith.constant 1 : index
    %c1_148 = arith.constant 1 : index
    %377 = memref.load %arg2[%c1_147, %c1_148] : memref<2x6xf32, #tpu.memory_space<smem>>
    %378 = vector.broadcast %377 : f32 to vector<1x256xf32>
    %379 = arith.addf %376, %378 : vector<1x256xf32>
    %cst_149 = arith.constant 0.000000e+00 : f32
    %380 = vector.broadcast %cst_149 : f32 to vector<1x256xf32>
    %c1_150 = arith.constant 1 : index
    %c4_151 = arith.constant 4 : index
    %381 = memref.load %arg2[%c1_150, %c4_151] : memref<2x6xf32, #tpu.memory_space<smem>>
    %382 = vector.broadcast %381 : f32 to vector<1x256xf32>
    %383 = arith.addf %380, %382 : vector<1x256xf32>
    %c0_152 = arith.constant 0 : index
    %c1_153 = arith.constant 1 : index
    %384 = memref.load %arg1[%c0_152, %c1_153] : memref<3x6xf32, #tpu.memory_space<smem>>
    %385 = vector.broadcast %384 : f32 to vector<1x256xf32>
    %386 = arith.mulf %282, %385 : vector<1x256xf32>
    %387 = arith.addf %379, %386 : vector<1x256xf32>
    %c0_154 = arith.constant 0 : index
    %c4_155 = arith.constant 4 : index
    %388 = memref.load %arg1[%c0_154, %c4_155] : memref<3x6xf32, #tpu.memory_space<smem>>
    %389 = vector.broadcast %388 : f32 to vector<1x256xf32>
    %390 = arith.mulf %282, %389 : vector<1x256xf32>
    %391 = arith.addf %383, %390 : vector<1x256xf32>
    %c1_156 = arith.constant 1 : index
    %c1_157 = arith.constant 1 : index
    %392 = memref.load %arg1[%c1_156, %c1_157] : memref<3x6xf32, #tpu.memory_space<smem>>
    %393 = vector.broadcast %392 : f32 to vector<1x256xf32>
    %394 = arith.mulf %284, %393 : vector<1x256xf32>
    %395 = arith.addf %387, %394 : vector<1x256xf32>
    %c1_158 = arith.constant 1 : index
    %c4_159 = arith.constant 4 : index
    %396 = memref.load %arg1[%c1_158, %c4_159] : memref<3x6xf32, #tpu.memory_space<smem>>
    %397 = vector.broadcast %396 : f32 to vector<1x256xf32>
    %398 = arith.mulf %284, %397 : vector<1x256xf32>
    %399 = arith.addf %391, %398 : vector<1x256xf32>
    %c2_160 = arith.constant 2 : index
    %c1_161 = arith.constant 1 : index
    %400 = memref.load %arg1[%c2_160, %c1_161] : memref<3x6xf32, #tpu.memory_space<smem>>
    %401 = vector.broadcast %400 : f32 to vector<1x256xf32>
    %402 = arith.mulf %286, %401 : vector<1x256xf32>
    %403 = arith.addf %395, %402 : vector<1x256xf32>
    %c2_162 = arith.constant 2 : index
    %c4_163 = arith.constant 4 : index
    %404 = memref.load %arg1[%c2_162, %c4_163] : memref<3x6xf32, #tpu.memory_space<smem>>
    %405 = vector.broadcast %404 : f32 to vector<1x256xf32>
    %406 = arith.mulf %286, %405 : vector<1x256xf32>
    %407 = arith.addf %399, %406 : vector<1x256xf32>
    %cst_164 = arith.constant 2.000000e+00 : f32
    %408 = vector.broadcast %cst_164 : f32 to vector<1x256xf32>
    %409 = arith.subf %407, %408 : vector<1x256xf32>
    %cst_165 = arith.constant 0.000000e+00 : f32
    %410 = vector.broadcast %cst_165 : f32 to vector<1x256xf32>
    %411 = arith.subf %410, %409 : vector<1x256xf32>
    %412 = math.exp %411 : vector<1x256xf32>
    %413 = vector.broadcast %5 : vector<8x1xf32> to vector<8x256xf32>
    %414 = vector.broadcast %403 : vector<1x256xf32> to vector<8x256xf32>
    %415 = arith.subf %413, %414 : vector<8x256xf32>
    %416 = vector.broadcast %412 : vector<1x256xf32> to vector<8x256xf32>
    %417 = arith.mulf %415, %416 : vector<8x256xf32>
    %418 = vector.broadcast %7 : vector<8x1xf32> to vector<8x256xf32>
    %419 = vector.broadcast %403 : vector<1x256xf32> to vector<8x256xf32>
    %420 = arith.subf %418, %419 : vector<8x256xf32>
    %421 = vector.broadcast %412 : vector<1x256xf32> to vector<8x256xf32>
    %422 = arith.mulf %420, %421 : vector<8x256xf32>
    %cst_166 = arith.constant 0.000000e+00 : f32
    %423 = vector.broadcast %cst_166 : f32 to vector<8x256xf32>
    %424 = arith.minimumf %417, %423 : vector<8x256xf32>
    %425 = math.absf %417 : vector<8x256xf32>
    %cst_167 = arith.constant 0.000000e+00 : f32
    %426 = vector.broadcast %cst_167 : f32 to vector<8x256xf32>
    %427 = arith.subf %426, %425 : vector<8x256xf32>
    %428 = math.exp %427 : vector<8x256xf32>
    %429 = math.log1p %428 : vector<8x256xf32>
    %430 = arith.subf %424, %429 : vector<8x256xf32>
    %cst_168 = arith.constant 0.000000e+00 : f32
    %431 = vector.broadcast %cst_168 : f32 to vector<8x256xf32>
    %432 = arith.minimumf %422, %431 : vector<8x256xf32>
    %433 = math.absf %422 : vector<8x256xf32>
    %cst_169 = arith.constant 0.000000e+00 : f32
    %434 = vector.broadcast %cst_169 : f32 to vector<8x256xf32>
    %435 = arith.subf %434, %433 : vector<8x256xf32>
    %436 = math.exp %435 : vector<8x256xf32>
    %437 = math.log1p %436 : vector<8x256xf32>
    %438 = arith.subf %432, %437 : vector<8x256xf32>
    %439 = arith.subf %430, %438 : vector<8x256xf32>
    %440 = math.exp %439 : vector<8x256xf32>
    %cst_170 = arith.constant 0.000000e+00 : f32
    %441 = vector.broadcast %cst_170 : f32 to vector<8x256xf32>
    %442 = arith.subf %441, %440 : vector<8x256xf32>
    %cst_171 = arith.constant 9.99999997E-7 : f32
    %443 = vector.broadcast %cst_171 : f32 to vector<8x256xf32>
    %444 = arith.addf %442, %443 : vector<8x256xf32>
    %445 = math.log1p %444 : vector<8x256xf32>
    %446 = arith.addf %438, %445 : vector<8x256xf32>
    %cst_172 = arith.constant 0.000000e+00 : f32
    %447 = vector.broadcast %cst_172 : f32 to vector<8x256xf32>
    %448 = arith.subf %447, %417 : vector<8x256xf32>
    %449 = arith.addf %448, %430 : vector<8x256xf32>
    %cst_173 = arith.constant 0.000000e+00 : f32
    %450 = vector.broadcast %cst_173 : f32 to vector<8x256xf32>
    %451 = arith.subf %450, %422 : vector<8x256xf32>
    %452 = arith.addf %451, %438 : vector<8x256xf32>
    %453 = arith.subf %452, %449 : vector<8x256xf32>
    %454 = math.exp %453 : vector<8x256xf32>
    %cst_174 = arith.constant 0.000000e+00 : f32
    %455 = vector.broadcast %cst_174 : f32 to vector<8x256xf32>
    %456 = arith.subf %455, %454 : vector<8x256xf32>
    %cst_175 = arith.constant 9.99999997E-7 : f32
    %457 = vector.broadcast %cst_175 : f32 to vector<8x256xf32>
    %458 = arith.addf %456, %457 : vector<8x256xf32>
    %459 = math.log1p %458 : vector<8x256xf32>
    %460 = arith.addf %449, %459 : vector<8x256xf32>
    %461 = arith.minimumf %446, %460 : vector<8x256xf32>
    %c4_176 = arith.constant 4 : index
    %c0_177 = arith.constant 0 : index
    %c0_178 = arith.constant 0 : index
    %462 = vector.load %arg3[%c4_176, %c0_177, %c0_178] : memref<6x8x256xf32, #tpu.memory_space<vmem>>, vector<1x8x256xf32>
    %463 = vector.shape_cast %462 : vector<1x8x256xf32> to vector<8x256xf32>
    %464 = vector.shape_cast %461 : vector<8x256xf32> to vector<1x8x256xf32>
    tpu.vector_store %arg3[%c4_176, %c0_177, %c0_178], %464 {strides = array<i32>} : memref<6x8x256xf32, #tpu.memory_space<vmem>>, vector<1x8x256xf32>,
    %cst_179 = arith.constant 0.000000e+00 : f32
    %465 = vector.broadcast %cst_179 : f32 to vector<1x256xf32>
    %c1_180 = arith.constant 1 : index
    %c2_181 = arith.constant 2 : index
    %466 = memref.load %arg2[%c1_180, %c2_181] : memref<2x6xf32, #tpu.memory_space<smem>>
    %467 = vector.broadcast %466 : f32 to vector<1x256xf32>
    %468 = arith.addf %465, %467 : vector<1x256xf32>
    %cst_182 = arith.constant 0.000000e+00 : f32
    %469 = vector.broadcast %cst_182 : f32 to vector<1x256xf32>
    %c1_183 = arith.constant 1 : index
    %c5_184 = arith.constant 5 : index
    %470 = memref.load %arg2[%c1_183, %c5_184] : memref<2x6xf32, #tpu.memory_space<smem>>
    %471 = vector.broadcast %470 : f32 to vector<1x256xf32>
    %472 = arith.addf %469, %471 : vector<1x256xf32>
    %c0_185 = arith.constant 0 : index
    %c2_186 = arith.constant 2 : index
    %473 = memref.load %arg1[%c0_185, %c2_186] : memref<3x6xf32, #tpu.memory_space<smem>>
    %474 = vector.broadcast %473 : f32 to vector<1x256xf32>
    %475 = arith.mulf %282, %474 : vector<1x256xf32>
    %476 = arith.addf %468, %475 : vector<1x256xf32>
    %c0_187 = arith.constant 0 : index
    %c5_188 = arith.constant 5 : index
    %477 = memref.load %arg1[%c0_187, %c5_188] : memref<3x6xf32, #tpu.memory_space<smem>>
    %478 = vector.broadcast %477 : f32 to vector<1x256xf32>
    %479 = arith.mulf %282, %478 : vector<1x256xf32>
    %480 = arith.addf %472, %479 : vector<1x256xf32>
    %c1_189 = arith.constant 1 : index
    %c2_190 = arith.constant 2 : index
    %481 = memref.load %arg1[%c1_189, %c2_190] : memref<3x6xf32, #tpu.memory_space<smem>>
    %482 = vector.broadcast %481 : f32 to vector<1x256xf32>
    %483 = arith.mulf %284, %482 : vector<1x256xf32>
    %484 = arith.addf %476, %483 : vector<1x256xf32>
    %c1_191 = arith.constant 1 : index
    %c5_192 = arith.constant 5 : index
    %485 = memref.load %arg1[%c1_191, %c5_192] : memref<3x6xf32, #tpu.memory_space<smem>>
    %486 = vector.broadcast %485 : f32 to vector<1x256xf32>
    %487 = arith.mulf %284, %486 : vector<1x256xf32>
    %488 = arith.addf %480, %487 : vector<1x256xf32>
    %c2_193 = arith.constant 2 : index
    %c2_194 = arith.constant 2 : index
    %489 = memref.load %arg1[%c2_193, %c2_194] : memref<3x6xf32, #tpu.memory_space<smem>>
    %490 = vector.broadcast %489 : f32 to vector<1x256xf32>
    %491 = arith.mulf %286, %490 : vector<1x256xf32>
    %492 = arith.addf %484, %491 : vector<1x256xf32>
    %c2_195 = arith.constant 2 : index
    %c5_196 = arith.constant 5 : index
    %493 = memref.load %arg1[%c2_195, %c5_196] : memref<3x6xf32, #tpu.memory_space<smem>>
    %494 = vector.broadcast %493 : f32 to vector<1x256xf32>
    %495 = arith.mulf %286, %494 : vector<1x256xf32>
    %496 = arith.addf %488, %495 : vector<1x256xf32>
    %cst_197 = arith.constant 2.000000e+00 : f32
    %497 = vector.broadcast %cst_197 : f32 to vector<1x256xf32>
    %498 = arith.subf %496, %497 : vector<1x256xf32>
    %cst_198 = arith.constant 0.000000e+00 : f32
    %499 = vector.broadcast %cst_198 : f32 to vector<1x256xf32>
    %500 = arith.subf %499, %498 : vector<1x256xf32>
    %501 = math.exp %500 : vector<1x256xf32>
    %502 = vector.broadcast %5 : vector<8x1xf32> to vector<8x256xf32>
    %503 = vector.broadcast %492 : vector<1x256xf32> to vector<8x256xf32>
    %504 = arith.subf %502, %503 : vector<8x256xf32>
    %505 = vector.broadcast %501 : vector<1x256xf32> to vector<8x256xf32>
    %506 = arith.mulf %504, %505 : vector<8x256xf32>
    %507 = vector.broadcast %7 : vector<8x1xf32> to vector<8x256xf32>
    %508 = vector.broadcast %492 : vector<1x256xf32> to vector<8x256xf32>
    %509 = arith.subf %507, %508 : vector<8x256xf32>
    %510 = vector.broadcast %501 : vector<1x256xf32> to vector<8x256xf32>
    %511 = arith.mulf %509, %510 : vector<8x256xf32>
    %cst_199 = arith.constant 0.000000e+00 : f32
    %512 = vector.broadcast %cst_199 : f32 to vector<8x256xf32>
    %513 = arith.minimumf %506, %512 : vector<8x256xf32>
    %514 = math.absf %506 : vector<8x256xf32>
    %cst_200 = arith.constant 0.000000e+00 : f32
    %515 = vector.broadcast %cst_200 : f32 to vector<8x256xf32>
    %516 = arith.subf %515, %514 : vector<8x256xf32>
    %517 = math.exp %516 : vector<8x256xf32>
    %518 = math.log1p %517 : vector<8x256xf32>
    %519 = arith.subf %513, %518 : vector<8x256xf32>
    %cst_201 = arith.constant 0.000000e+00 : f32
    %520 = vector.broadcast %cst_201 : f32 to vector<8x256xf32>
    %521 = arith.minimumf %511, %520 : vector<8x256xf32>
    %522 = math.absf %511 : vector<8x256xf32>
    %cst_202 = arith.constant 0.000000e+00 : f32
    %523 = vector.broadcast %cst_202 : f32 to vector<8x256xf32>
    %524 = arith.subf %523, %522 : vector<8x256xf32>
    %525 = math.exp %524 : vector<8x256xf32>
    %526 = math.log1p %525 : vector<8x256xf32>
    %527 = arith.subf %521, %526 : vector<8x256xf32>
    %528 = arith.subf %519, %527 : vector<8x256xf32>
    %529 = math.exp %528 : vector<8x256xf32>
    %cst_203 = arith.constant 0.000000e+00 : f32
    %530 = vector.broadcast %cst_203 : f32 to vector<8x256xf32>
    %531 = arith.subf %530, %529 : vector<8x256xf32>
    %cst_204 = arith.constant 9.99999997E-7 : f32
    %532 = vector.broadcast %cst_204 : f32 to vector<8x256xf32>
    %533 = arith.addf %531, %532 : vector<8x256xf32>
    %534 = math.log1p %533 : vector<8x256xf32>
    %535 = arith.addf %527, %534 : vector<8x256xf32>
    %cst_205 = arith.constant 0.000000e+00 : f32
    %536 = vector.broadcast %cst_205 : f32 to vector<8x256xf32>
    %537 = arith.subf %536, %506 : vector<8x256xf32>
    %538 = arith.addf %537, %519 : vector<8x256xf32>
    %cst_206 = arith.constant 0.000000e+00 : f32
    %539 = vector.broadcast %cst_206 : f32 to vector<8x256xf32>
    %540 = arith.subf %539, %511 : vector<8x256xf32>
    %541 = arith.addf %540, %527 : vector<8x256xf32>
    %542 = arith.subf %541, %538 : vector<8x256xf32>
    %543 = math.exp %542 : vector<8x256xf32>
    %cst_207 = arith.constant 0.000000e+00 : f32
    %544 = vector.broadcast %cst_207 : f32 to vector<8x256xf32>
    %545 = arith.subf %544, %543 : vector<8x256xf32>
    %cst_208 = arith.constant 9.99999997E-7 : f32
    %546 = vector.broadcast %cst_208 : f32 to vector<8x256xf32>
    %547 = arith.addf %545, %546 : vector<8x256xf32>
    %548 = math.log1p %547 : vector<8x256xf32>
    %549 = arith.addf %538, %548 : vector<8x256xf32>
    %550 = arith.minimumf %535, %549 : vector<8x256xf32>
    %c5_209 = arith.constant 5 : index
    %c0_210 = arith.constant 0 : index
    %c0_211 = arith.constant 0 : index
    %551 = vector.load %arg3[%c5_209, %c0_210, %c0_211] : memref<6x8x256xf32, #tpu.memory_space<vmem>>, vector<1x8x256xf32>
    %552 = vector.shape_cast %551 : vector<1x8x256xf32> to vector<8x256xf32>
    %553 = vector.shape_cast %550 : vector<8x256xf32> to vector<1x8x256xf32>
    tpu.vector_store %arg3[%c5_209, %c0_210, %c0_211], %553 {strides = array<i32>} : memref<6x8x256xf32, #tpu.memory_space<vmem>>, vector<1x8x256xf32>,
    return
  }
}

</mosaic_0001>

<llo_original>
// kernel: image_x0_pred_forward.1
$region0: #{image_x0_pred_forward.1}
  #allocation0 [shape = 'u32[]', space=smem, size = 0x4, offset = 0x4, fixed_abs, tag = 'smem constant byte address 0x4 - core index']
  #allocation1 [shape = 'u32[144,128]{1,0:T(1,128)}', space=vmem, size = 0x12000, scoped, tag = 'internal scratch']
  %s0 = inlined_call_operand.vmem [shape: f32[2,3,256], index: 0, kind: input, shape index: {}]
  %s1 = inlined_call_operand.vmem [shape: f32[3,6], index: 1, kind: input, shape index: {}]
  %s2 = inlined_call_operand.vmem [shape: f32[2,6], index: 2, kind: input, shape index: {}]
  %s3 = inlined_call_operand.hbm [shape: f32[6,8,256], index: 3, kind: output, shape index: {}]
  %s4 = sld [smem:[#allocation0]]
  $region30: #{image_x0_pred_forward.1} parent=0
    _
  %s6 = ssub.s32 1, %s4
  %s7 = scalar_select 0, %s6, %s4
  $region1: #{image_x0_pred_forward.1} parent=0
    #allocation2 [shape = 'u8[2048]{0}', space=smem, size = 0x800, scoped, tag = 'input window, operand 1, single buffered']
    #allocation3 [shape = 's32[1]{0}', space=sflag, size = 0x4, scoped, tag = 'scoped memory for image_x0_pred_forward.1']
    #allocation4 [shape = 's32[1]{0}', space=sflag, size = 0x4, scoped, tag = 'scoped memory for image_x0_pred_forward.1']
    #allocation5 [shape = 'u8[1024]{0}', space=smem, size = 0x400, scoped, tag = 'input window, operand 2, single buffered']
    #allocation6 [shape = 's32[1]{0}', space=sflag, size = 0x4, scoped, tag = 'scoped memory for image_x0_pred_forward.1']
    #allocation7 [shape = 'u8[49152]{0}', space=vmem, size = 0xc000, scoped, tag = 'output window, operand 0, single buffered']
    %8 = vsyncpa [#allocation4], 0
    %9 = vsyncpa [#allocation6], 0
    %10 = vsyncpa [#allocation3], 0
    // Predicated region
    $region2: #{image_x0_pred_forward.1} parent=1 // pred_check
      _
    $region3: #{image_x0_pred_forward.1} parent=1 // pred_check_branch
      %12 = sbr.rel (0) target = $region5
    $region4: #{image_x0_pred_forward.1} parent=1 // pred_region
      _
    $region5: #{image_x0_pred_forward.1} parent=1 // pred_fallthru
      _
    // Predicated region
    $region6: #{image_x0_pred_forward.1} parent=1 // pred_check
      _
    $region7: #{image_x0_pred_forward.1} parent=1 // pred_check_branch
      %14 = sbr.rel (0) target = $region9
    $region8: #{image_x0_pred_forward.1} parent=1 // pred_region
      %s16 = ssub.s32 64, 64
      %17 = vsyncadd [#allocation4], %s16
      %s19 = sshll.u32 %s1, 4
      %s20 = int_to_ptr.vmem [resolvable:$true] %s19
      %22 = dma.vmem_to_smem %s20, 64, [#allocation2], [#allocation4]
    $region9: #{image_x0_pred_forward.1} parent=1 // pred_fallthru
      _
    // Predicated region
    $region10: #{image_x0_pred_forward.1} parent=1 // pred_check
      _
    $region11: #{image_x0_pred_forward.1} parent=1 // pred_check_branch
      %24 = sbr.rel (0) target = $region13
    $region12: #{image_x0_pred_forward.1} parent=1 // pred_region
      %s26 = ssub.s32 32, 32
      %27 = vsyncadd [#allocation6], %s26
      %s29 = sshll.u32 %s2, 4
      %s30 = int_to_ptr.vmem [resolvable:$true] %s29
      %32 = dma.vmem_to_smem %s30, 32, [#allocation5], [#allocation6]
    $region13: #{image_x0_pred_forward.1} parent=1 // pred_fallthru
      _
    // Predicated region
    $region14: #{image_x0_pred_forward.1} parent=1 // pred_check
      _
    $region15: #{image_x0_pred_forward.1} parent=1 // pred_check_branch
      %34 = sbr.rel (0) target = $region17
    $region16: #{image_x0_pred_forward.1} parent=1 // pred_region
      %35 = dma.done [#allocation4], 64
    $region17: #{image_x0_pred_forward.1} parent=1 // pred_fallthru
      _
    // Predicated region
    $region18: #{image_x0_pred_forward.1} parent=1 // pred_check
      _
    $region19: #{image_x0_pred_forward.1} parent=1 // pred_check_branch
      %37 = sbr.rel (0) target = $region21
    $region20: #{image_x0_pred_forward.1} parent=1 // pred_region
      %38 = dma.done [#allocation6], 32
    $region21: #{image_x0_pred_forward.1} parent=1 // pred_fallthru
      _
    %39 = sfence
    %v40 = vlaneseq
    %v41 = vshrl.u32 %v40, 7
    %v42 = vcvt.s32.f32 %v41
    %v43 = vmul.f32 %v42, 0.25
    %v44 = vadd.f32 %v43, -1.0
    %v45 = vadd.f32 %v44, 0.25
    %v46 = vld [vmem:[%s0] ss:$4 sm:$0x3]
    %s47 = scalar_lea.vmem %s0, 1
    %v48 = vld [vmem:[%s47] ss:$4 sm:$0x3]
    %s49 = scalar_lea.vmem %s0, 2
    %v50 = vld [vmem:[%s49] ss:$4 sm:$0x3]
    %s51 = sld [smem:[#allocation5]]
    %v52 = vstv %s51
    %v53 = vadd.f32 %v52, 0.0
    %s54 = sld [smem:[#allocation5 + $0x3]]
    %v55 = vstv %s54
    %v56 = vadd.f32 %v55, 0.0
    %s57 = sld [smem:[#allocation2]]
    %v58 = vstv %s57
    %v59 = vmul.f32 %v46, %v58
    %v60 = vadd.f32 %v53, %v59
    %s61 = sld [smem:[#allocation2 + $0x3]]
    %v62 = vstv %s61
    %v63 = vmul.f32 %v46, %v62
    %v64 = vadd.f32 %v56, %v63
    %s65 = sld [smem:[#allocation2 + $0x80]]
    %v66 = vstv %s65
    %v67 = vmul.f32 %v48, %v66
    %v68 = vadd.f32 %v60, %v67
    %s69 = sld [smem:[#allocation2 + $0x83]]
    %v70 = vstv %s69
    %v71 = vmul.f32 %v48, %v70
    %v72 = vadd.f32 %v64, %v71
    %s73 = sld [smem:[#allocation2 + $0x100]]
    %v74 = vstv %s73
    %v75 = vmul.f32 %v50, %v74
    %v76 = vadd.f32 %v68, %v75
    %s77 = sld [smem:[#allocation2 + $0x103]]
    %v78 = vstv %s77
    %v79 = vmul.f32 %v50, %v78
    %v80 = vadd.f32 %v72, %v79
    %v81 = vsub.f32 %v80, 2.0
    %v82 = vsub.f32 0.0, %v81
    %v83 = vmul.f32 %v82, 1.442695
    %v84 = vpow.pop %v83
    %v86 = vlaneseq
    %v87 = vshrl.u32 %v86, 7
    %v88 = vsub.s32 0, %v87
    %v89 = vrot.slane %v76, %v88
    %v90 = vlaneseq
    %v91 = vshrl.u32 %v90, 7
    %v92 = vsub.s32 1, %v91
    %v93 = vrot.slane %v76, %v92
    %v96 = vsub.f32 %v44, %v89
    %v97 = vsub.f32 %v44, %v93
    %v99 = vlaneseq
    %v100 = vshrl.u32 %v99, 7
    %v101 = vsub.s32 0, %v100
    %v102 = vrot.slane %v84, %v101
    %v103 = vlaneseq
    %v104 = vshrl.u32 %v103, 7
    %v105 = vsub.s32 1, %v104
    %v106 = vrot.slane %v84, %v105
    %v109 = vmul.f32 %v96, %v102
    %v110 = vmul.f32 %v97, %v106
    %v111 = vsub.f32 %v45, %v89
    %v112 = vsub.f32 %v45, %v93
    %v113 = vmul.f32 %v111, %v102
    %v114 = vmul.f32 %v112, %v106
    %v115 = vmin.f32 %v109, 0.0
    %v116 = vmin.f32 %v110, 0.0
    %v117 = vand.u32 2147483647, %v109
    %v118 = vand.u32 2147483647, %v110
    %v119 = vsub.f32 0.0, %v117
    %v120 = vsub.f32 0.0, %v118
    %v121 = vmul.f32 %v119, 1.442695
    %v122 = vpow.pop %v121
    %v123 = vmul.f32 %v120, 1.442695
    %v124 = vpow.pop %v123
    %v125 = vadd.f32 %v122, 1.0
    %v126 = vlog2.pop %v125
    %v127 = vmul.f32 %v126, 0.6931472
    %v128 = vmul.f32 -0.5, %v122
    %v129 = vadd.f32 %v128, 1.0
    %v130 = vmul.f32 %v129, %v122
    %v131 = vand.u32 2147483647, %v122
    %vm132 = vcmp.lt.f32.partialorder %v131, 0.0004427343
    %v133 = vsel %vm132, %v130, %v127
    %v134 = vadd.f32 %v124, 1.0
    %v135 = vlog2.pop %v134
    %v136 = vmul.f32 %v135, 0.6931472
    %v137 = vmul.f32 -0.5, %v124
    %v138 = vadd.f32 %v137, 1.0
    %v139 = vmul.f32 %v138, %v124
    %v140 = vand.u32 2147483647, %v124
    %vm141 = vcmp.lt.f32.partialorder %v140, 0.0004427343
    %v142 = vsel %vm141, %v139, %v136
    %v143 = vsub.f32 %v115, %v133
    %v144 = vsub.f32 %v116, %v142
    %v145 = vmin.f32 %v113, 0.0
    %v146 = vmin.f32 %v114, 0.0
    %v147 = vand.u32 2147483647, %v113
    %v148 = vand.u32 2147483647, %v114
    %v149 = vsub.f32 0.0, %v147
    %v150 = vsub.f32 0.0, %v148
    %v151 = vmul.f32 %v149, 1.442695
    %v152 = vpow.pop %v151
    %v153 = vmul.f32 %v150, 1.442695
    %v154 = vpow.pop %v153
    %v155 = vadd.f32 %v152, 1.0
    %v156 = vlog2.pop %v155
    %v157 = vmul.f32 %v156, 0.6931472
    %v158 = vmul.f32 -0.5, %v152
    %v159 = vadd.f32 %v158, 1.0
    %v160 = vmul.f32 %v159, %v152
    %v161 = vand.u32 2147483647, %v152
    %vm162 = vcmp.lt.f32.partialorder %v161, 0.0004427343
    %v163 = vsel %vm162, %v160, %v157
    %v164 = vadd.f32 %v154, 1.0
    %v165 = vlog2.pop %v164
    %v166 = vmul.f32 %v165, 0.6931472
    %v167 = vmul.f32 -0.5, %v154
    %v168 = vadd.f32 %v167, 1.0
    %v169 = vmul.f32 %v168, %v154
    %v170 = vand.u32 2147483647, %v154
    %vm171 = vcmp.lt.f32.partialorder %v170, 0.0004427343
    %v172 = vsel %vm171, %v169, %v166
    %v173 = vsub.f32 %v145, %v163
    %v174 = vsub.f32 %v146, %v172
    %v175 = vsub.f32 %v143, %v173
    %v176 = vsub.f32 %v144, %v174
    %v177 = vmul.f32 %v175, 1.442695
    %v178 = vpow.pop %v177
    %v179 = vmul.f32 %v176, 1.442695
    %v180 = vpow.pop %v179
    %v181 = vsub.f32 0.0, %v178
    %v182 = vsub.f32 0.0, %v180
    %v183 = vadd.f32 %v181, 1e-06
    %v184 = vadd.f32 %v182, 1e-06
    %v185 = vadd.f32 %v183, 1.0
    %v186 = vlog2.pop %v185
    %v187 = vmul.f32 %v186, 0.6931472
    %v188 = vmul.f32 -0.5, %v183
    %v189 = vadd.f32 %v188, 1.0
    %v190 = vmul.f32 %v189, %v183
    %v191 = vand.u32 2147483647, %v183
    %vm192 = vcmp.lt.f32.partialorder %v191, 0.0004427343
    %v193 = vsel %vm192, %v190, %v187
    %v194 = vadd.f32 %v184, 1.0
    %v195 = vlog2.pop %v194
    %v196 = vmul.f32 %v195, 0.6931472
    %v197 = vmul.f32 -0.5, %v184
    %v198 = vadd.f32 %v197, 1.0
    %v199 = vmul.f32 %v198, %v184
    %v200 = vand.u32 2147483647, %v184
    %vm201 = vcmp.lt.f32.partialorder %v200, 0.0004427343
    %v202 = vsel %vm201, %v199, %v196
    %v203 = vadd.f32 %v173, %v193
    %v204 = vadd.f32 %v174, %v202
    %v205 = vsub.f32 0.0, %v109
    %v206 = vsub.f32 0.0, %v110
    %v207 = vadd.f32 %v205, %v143
    %v208 = vadd.f32 %v206, %v144
    %v209 = vsub.f32 0.0, %v113
    %v210 = vsub.f32 0.0, %v114
    %v211 = vadd.f32 %v209, %v173
    %v212 = vadd.f32 %v210, %v174
    %v213 = vsub.f32 %v211, %v207
    %v214 = vsub.f32 %v212, %v208
    %v215 = vmul.f32 %v213, 1.442695
    %v216 = vpow.pop %v215
    %v217 = vmul.f32 %v214, 1.442695
    %v218 = vpow.pop %v217
    %v219 = vsub.f32 0.0, %v216
    %v220 = vsub.f32 0.0, %v218
    %v221 = vadd.f32 %v219, 1e-06
    %v222 = vadd.f32 %v220, 1e-06
    %v223 = vadd.f32 %v221, 1.0
    %v224 = vlog2.pop %v223
    %v225 = vmul.f32 %v224, 0.6931472
    %v226 = vmul.f32 -0.5, %v221
    %v227 = vadd.f32 %v226, 1.0
    %v228 = vmul.f32 %v227, %v221
    %v229 = vand.u32 2147483647, %v221
    %vm230 = vcmp.lt.f32.partialorder %v229, 0.0004427343
    %v231 = vsel %vm230, %v228, %v225
    %v232 = vadd.f32 %v222, 1.0
    %v233 = vlog2.pop %v232
    %v234 = vmul.f32 %v233, 0.6931472
    %v235 = vmul.f32 -0.5, %v222
    %v236 = vadd.f32 %v235, 1.0
    %v237 = vmul.f32 %v236, %v222
    %v238 = vand.u32 2147483647, %v222
    %vm239 = vcmp.lt.f32.partialorder %v238, 0.0004427343
    %v240 = vsel %vm239, %v237, %v234
    %v241 = vadd.f32 %v207, %v231
    %v242 = vadd.f32 %v208, %v240
    %v243 = vmin.f32 %v203, %v241
    %v244 = vmin.f32 %v204, %v242
    %245 = vst [vmem:[#allocation7] sm:$0xff] %v243
    %246 = vst [vmem:[#allocation7 + $0x8] sm:$0xff] %v244
    %s247 = sld [smem:[#allocation5 + $0x1]]
    %v248 = vstv %s247
    %v249 = vadd.f32 %v248, 0.0
    %s250 = sld [smem:[#allocation5 + $0x4]]
    %v251 = vstv %s250
    %v252 = vadd.f32 %v251, 0.0
    %s253 = sld [smem:[#allocation2 + $0x1]]
    %v254 = vstv %s253
    %v255 = vmul.f32 %v46, %v254
    %v256 = vadd.f32 %v249, %v255
    %s257 = sld [smem:[#allocation2 + $0x4]]
    %v258 = vstv %s257
    %v259 = vmul.f32 %v46, %v258
    %v260 = vadd.f32 %v252, %v259
    %s261 = sld [smem:[#allocation2 + $0x81]]
    %v262 = vstv %s261
    %v263 = vmul.f32 %v48, %v262
    %v264 = vadd.f32 %v256, %v263
    %s265 = sld [smem:[#allocation2 + $0x84]]
    %v266 = vstv %s265
    %v267 = vmul.f32 %v48, %v266
    %v268 = vadd.f32 %v260, %v267
    %s269 = sld [smem:[#allocation2 + $0x101]]
    %v270 = vstv %s269
    %v271 = vmul.f32 %v50, %v270
    %v272 = vadd.f32 %v264, %v271
    %s273 = sld [smem:[#allocation2 + $0x104]]
    %v274 = vstv %s273
    %v275 = vmul.f32 %v50, %v274
    %v276 = vadd.f32 %v268, %v275
    %v277 = vsub.f32 %v276, 2.0
    %v278 = vsub.f32 0.0, %v277
    %v279 = vmul.f32 %v278, 1.442695
    %v280 = vpow.pop %v279
    %v282 = vlaneseq
    %v283 = vshrl.u32 %v282, 7
    %v284 = vsub.s32 0, %v283
    %v285 = vrot.slane %v272, %v284
    %v286 = vlaneseq
    %v287 = vshrl.u32 %v286, 7
    %v288 = vsub.s32 1, %v287
    %v289 = vrot.slane %v272, %v288
    %v292 = vsub.f32 %v44, %v285
    %v293 = vsub.f32 %v44, %v289
    %v295 = vlaneseq
    %v296 = vshrl.u32 %v295, 7
    %v297 = vsub.s32 0, %v296
    %v298 = vrot.slane %v280, %v297
    %v299 = vlaneseq
    %v300 = vshrl.u32 %v299, 7
    %v301 = vsub.s32 1, %v300
    %v302 = vrot.slane %v280, %v301
    %v305 = vmul.f32 %v292, %v298
    %v306 = vmul.f32 %v293, %v302
    %v307 = vsub.f32 %v45, %v285
    %v308 = vsub.f32 %v45, %v289
    %v309 = vmul.f32 %v307, %v298
    %v310 = vmul.f32 %v308, %v302
    %v311 = vmin.f32 %v305, 0.0
    %v312 = vmin.f32 %v306, 0.0
    %v313 = vand.u32 2147483647, %v305
    %v314 = vand.u32 2147483647, %v306
    %v315 = vsub.f32 0.0, %v313
    %v316 = vsub.f32 0.0, %v314
    %v317 = vmul.f32 %v315, 1.442695
    %v318 = vpow.pop %v317
    %v319 = vmul.f32 %v316, 1.442695
    %v320 = vpow.pop %v319
    %v321 = vadd.f32 %v318, 1.0
    %v322 = vlog2.pop %v321
    %v323 = vmul.f32 %v322, 0.6931472
    %v324 = vmul.f32 -0.5, %v318
    %v325 = vadd.f32 %v324, 1.0
    %v326 = vmul.f32 %v325, %v318
    %v327 = vand.u32 2147483647, %v318
    %vm328 = vcmp.lt.f32.partialorder %v327, 0.0004427343
    %v329 = vsel %vm328, %v326, %v323
    %v330 = vadd.f32 %v320, 1.0
    %v331 = vlog2.pop %v330
    %v332 = vmul.f32 %v331, 0.6931472
    %v333 = vmul.f32 -0.5, %v320
    %v334 = vadd.f32 %v333, 1.0
    %v335 = vmul.f32 %v334, %v320
    %v336 = vand.u32 2147483647, %v320
    %vm337 = vcmp.lt.f32.partialorder %v336, 0.0004427343
    %v338 = vsel %vm337, %v335, %v332
    %v339 = vsub.f32 %v311, %v329
    %v340 = vsub.f32 %v312, %v338
    %v341 = vmin.f32 %v309, 0.0
    %v342 = vmin.f32 %v310, 0.0
    %v343 = vand.u32 2147483647, %v309
    %v344 = vand.u32 2147483647, %v310
    %v345 = vsub.f32 0.0, %v343
    %v346 = vsub.f32 0.0, %v344
    %v347 = vmul.f32 %v345, 1.442695
    %v348 = vpow.pop %v347
    %v349 = vmul.f32 %v346, 1.442695
    %v350 = vpow.pop %v349
    %v351 = vadd.f32 %v348, 1.0
    %v352 = vlog2.pop %v351
    %v353 = vmul.f32 %v352, 0.6931472
    %v354 = vmul.f32 -0.5, %v348
    %v355 = vadd.f32 %v354, 1.0
    %v356 = vmul.f32 %v355, %v348
    %v357 = vand.u32 2147483647, %v348
    %vm358 = vcmp.lt.f32.partialorder %v357, 0.0004427343
    %v359 = vsel %vm358, %v356, %v353
    %v360 = vadd.f32 %v350, 1.0
    %v361 = vlog2.pop %v360
    %v362 = vmul.f32 %v361, 0.6931472
    %v363 = vmul.f32 -0.5, %v350
    %v364 = vadd.f32 %v363, 1.0
    %v365 = vmul.f32 %v364, %v350
    %v366 = vand.u32 2147483647, %v350
    %vm367 = vcmp.lt.f32.partialorder %v366, 0.0004427343
    %v368 = vsel %vm367, %v365, %v362
    %v369 = vsub.f32 %v341, %v359
    %v370 = vsub.f32 %v342, %v368
    %v371 = vsub.f32 %v339, %v369
    %v372 = vsub.f32 %v340, %v370
    %v373 = vmul.f32 %v371, 1.442695
    %v374 = vpow.pop %v373
    %v375 = vmul.f32 %v372, 1.442695
    %v376 = vpow.pop %v375
    %v377 = vsub.f32 0.0, %v374
    %v378 = vsub.f32 0.0, %v376
    %v379 = vadd.f32 %v377, 1e-06
    %v380 = vadd.f32 %v378, 1e-06
    %v381 = vadd.f32 %v379, 1.0
    %v382 = vlog2.pop %v381
    %v383 = vmul.f32 %v382, 0.6931472
    %v384 = vmul.f32 -0.5, %v379
    %v385 = vadd.f32 %v384, 1.0
    %v386 = vmul.f32 %v385, %v379
    %v387 = vand.u32 2147483647, %v379
    %vm388 = vcmp.lt.f32.partialorder %v387, 0.0004427343
    %v389 = vsel %vm388, %v386, %v383
    %v390 = vadd.f32 %v380, 1.0
    %v391 = vlog2.pop %v390
    %v392 = vmul.f32 %v391, 0.6931472
    %v393 = vmul.f32 -0.5, %v380
    %v394 = vadd.f32 %v393, 1.0
    %v395 = vmul.f32 %v394, %v380
    %v396 = vand.u32 2147483647, %v380
    %vm397 = vcmp.lt.f32.partialorder %v396, 0.0004427343
    %v398 = vsel %vm397, %v395, %v392
    %v399 = vadd.f32 %v369, %v389
    %v400 = vadd.f32 %v370, %v398
    %v401 = vsub.f32 0.0, %v305
    %v402 = vsub.f32 0.0, %v306
    %v403 = vadd.f32 %v401, %v339
    %v404 = vadd.f32 %v402, %v340
    %v405 = vsub.f32 0.0, %v309
    %v406 = vsub.f32 0.0, %v310
    %v407 = vadd.f32 %v405, %v369
    %v408 = vadd.f32 %v406, %v370
    %v409 = vsub.f32 %v407, %v403
    %v410 = vsub.f32 %v408, %v404
    %v411 = vmul.f32 %v409, 1.442695
    %v412 = vpow.pop %v411
    %v413 = vmul.f32 %v410, 1.442695
    %v414 = vpow.pop %v413
    %v415 = vsub.f32 0.0, %v412
    %v416 = vsub.f32 0.0, %v414
    %v417 = vadd.f32 %v415, 1e-06
    %v418 = vadd.f32 %v416, 1e-06
    %v419 = vadd.f32 %v417, 1.0
    %v420 = vlog2.pop %v419
    %v421 = vmul.f32 %v420, 0.6931472
    %v422 = vmul.f32 -0.5, %v417
    %v423 = vadd.f32 %v422, 1.0
    %v424 = vmul.f32 %v423, %v417
    %v425 = vand.u32 2147483647, %v417
    %vm426 = vcmp.lt.f32.partialorder %v425, 0.0004427343
    %v427 = vsel %vm426, %v424, %v421
    %v428 = vadd.f32 %v418, 1.0
    %v429 = vlog2.pop %v428
    %v430 = vmul.f32 %v429, 0.6931472
    %v431 = vmul.f32 -0.5, %v418
    %v432 = vadd.f32 %v431, 1.0
    %v433 = vmul.f32 %v432, %v418
    %v434 = vand.u32 2147483647, %v418
    %vm435 = vcmp.lt.f32.partialorder %v434, 0.0004427343
    %v436 = vsel %vm435, %v433, %v430
    %v437 = vadd.f32 %v403, %v427
    %v438 = vadd.f32 %v404, %v436
    %v439 = vmin.f32 %v399, %v437
    %v440 = vmin.f32 %v400, %v438
    %s441 = scalar_lea.vmem [#allocation7], 16
    %442 = vst [vmem:[%s441] sm:$0xff] %v439
    %443 = vst [vmem:[%s441 + $0x8] sm:$0xff] %v440
    %s444 = sld [smem:[#allocation5 + $0x2]]
    %v445 = vstv %s444
    %v446 = vadd.f32 %v445, 0.0
    %s447 = sld [smem:[#allocation5 + $0x5]]
    %v448 = vstv %s447
    %v449 = vadd.f32 %v448, 0.0
    %s450 = sld [smem:[#allocation2 + $0x2]]
    %v451 = vstv %s450
    %v452 = vmul.f32 %v46, %v451
    %v453 = vadd.f32 %v446, %v452
    %s454 = sld [smem:[#allocation2 + $0x5]]
    %v455 = vstv %s454
    %v456 = vmul.f32 %v46, %v455
    %v457 = vadd.f32 %v449, %v456
    %s458 = sld [smem:[#allocation2 + $0x82]]
    %v459 = vstv %s458
    %v460 = vmul.f32 %v48, %v459
    %v461 = vadd.f32 %v453, %v460
    %s462 = sld [smem:[#allocation2 + $0x85]]
    %v463 = vstv %s462
    %v464 = vmul.f32 %v48, %v463
    %v465 = vadd.f32 %v457, %v464
    %s466 = sld [smem:[#allocation2 + $0x102]]
    %v467 = vstv %s466
    %v468 = vmul.f32 %v50, %v467
    %v469 = vadd.f32 %v461, %v468
    %s470 = sld [smem:[#allocation2 + $0x105]]
    %v471 = vstv %s470
    %v472 = vmul.f32 %v50, %v471
    %v473 = vadd.f32 %v465, %v472
    %v474 = vsub.f32 %v473, 2.0
    %v475 = vsub.f32 0.0, %v474
    %v476 = vmul.f32 %v475, 1.442695
    %v477 = vpow.pop %v476
    %v479 = vlaneseq
    %v480 = vshrl.u32 %v479, 7
    %v481 = vsub.s32 0, %v480
    %v482 = vrot.slane %v469, %v481
    %v483 = vlaneseq
    %v484 = vshrl.u32 %v483, 7
    %v485 = vsub.s32 1, %v484
    %v486 = vrot.slane %v469, %v485
    %v489 = vsub.f32 %v44, %v482
    %v490 = vsub.f32 %v44, %v486
    %v492 = vlaneseq
    %v493 = vshrl.u32 %v492, 7
    %v494 = vsub.s32 0, %v493
    %v495 = vrot.slane %v477, %v494
    %v496 = vlaneseq
    %v497 = vshrl.u32 %v496, 7
    %v498 = vsub.s32 1, %v497
    %v499 = vrot.slane %v477, %v498
    %v502 = vmul.f32 %v489, %v495
    %v503 = vmul.f32 %v490, %v499
    %v504 = vsub.f32 %v45, %v482
    %v505 = vsub.f32 %v45, %v486
    %v506 = vmul.f32 %v504, %v495
    %v507 = vmul.f32 %v505, %v499
    %v508 = vmin.f32 %v502, 0.0
    %v509 = vmin.f32 %v503, 0.0
    %v510 = vand.u32 2147483647, %v502
    %v511 = vand.u32 2147483647, %v503
    %v512 = vsub.f32 0.0, %v510
    %v513 = vsub.f32 0.0, %v511
    %v514 = vmul.f32 %v512, 1.442695
    %v515 = vpow.pop %v514
    %v516 = vmul.f32 %v513, 1.442695
    %v517 = vpow.pop %v516
    %v518 = vadd.f32 %v515, 1.0
    %v519 = vlog2.pop %v518
    %v520 = vmul.f32 %v519, 0.6931472
    %v521 = vmul.f32 -0.5, %v515
    %v522 = vadd.f32 %v521, 1.0
    %v523 = vmul.f32 %v522, %v515
    %v524 = vand.u32 2147483647, %v515
    %vm525 = vcmp.lt.f32.partialorder %v524, 0.0004427343
    %v526 = vsel %vm525, %v523, %v520
    %v527 = vadd.f32 %v517, 1.0
    %v528 = vlog2.pop %v527
    %v529 = vmul.f32 %v528, 0.6931472
    %v530 = vmul.f32 -0.5, %v517
    %v531 = vadd.f32 %v530, 1.0
    %v532 = vmul.f32 %v531, %v517
    %v533 = vand.u32 2147483647, %v517
    %vm534 = vcmp.lt.f32.partialorder %v533, 0.0004427343
    %v535 = vsel %vm534, %v532, %v529
    %v536 = vsub.f32 %v508, %v526
    %v537 = vsub.f32 %v509, %v535
    %v538 = vmin.f32 %v506, 0.0
    %v539 = vmin.f32 %v507, 0.0
    %v540 = vand.u32 2147483647, %v506
    %v541 = vand.u32 2147483647, %v507
    %v542 = vsub.f32 0.0, %v540
    %v543 = vsub.f32 0.0, %v541
    %v544 = vmul.f32 %v542, 1.442695
    %v545 = vpow.pop %v544
    %v546 = vmul.f32 %v543, 1.442695
    %v547 = vpow.pop %v546
    %v548 = vadd.f32 %v545, 1.0
    %v549 = vlog2.pop %v548
    %v550 = vmul.f32 %v549, 0.6931472
    %v551 = vmul.f32 -0.5, %v545
    %v552 = vadd.f32 %v551, 1.0
    %v553 = vmul.f32 %v552, %v545
    %v554 = vand.u32 2147483647, %v545
    %vm555 = vcmp.lt.f32.partialorder %v554, 0.0004427343
    %v556 = vsel %vm555, %v553, %v550
    %v557 = vadd.f32 %v547, 1.0
    %v558 = vlog2.pop %v557
    %v559 = vmul.f32 %v558, 0.6931472
    %v560 = vmul.f32 -0.5, %v547
    %v561 = vadd.f32 %v560, 1.0
    %v562 = vmul.f32 %v561, %v547
    %v563 = vand.u32 2147483647, %v547
    %vm564 = vcmp.lt.f32.partialorder %v563, 0.0004427343
    %v565 = vsel %vm564, %v562, %v559
    %v566 = vsub.f32 %v538, %v556
    %v567 = vsub.f32 %v539, %v565
    %v568 = vsub.f32 %v536, %v566
    %v569 = vsub.f32 %v537, %v567
    %v570 = vmul.f32 %v568, 1.442695
    %v571 = vpow.pop %v570
    %v572 = vmul.f32 %v569, 1.442695
    %v573 = vpow.pop %v572
    %v574 = vsub.f32 0.0, %v571
    %v575 = vsub.f32 0.0, %v573
    %v576 = vadd.f32 %v574, 1e-06
    %v577 = vadd.f32 %v575, 1e-06
    %v578 = vadd.f32 %v576, 1.0
    %v579 = vlog2.pop %v578
    %v580 = vmul.f32 %v579, 0.6931472
    %v581 = vmul.f32 -0.5, %v576
    %v582 = vadd.f32 %v581, 1.0
    %v583 = vmul.f32 %v582, %v576
    %v584 = vand.u32 2147483647, %v576
    %vm585 = vcmp.lt.f32.partialorder %v584, 0.0004427343
    %v586 = vsel %vm585, %v583, %v580
    %v587 = vadd.f32 %v577, 1.0
    %v588 = vlog2.pop %v587
    %v589 = vmul.f32 %v588, 0.6931472
    %v590 = vmul.f32 -0.5, %v577
    %v591 = vadd.f32 %v590, 1.0
    %v592 = vmul.f32 %v591, %v577
    %v593 = vand.u32 2147483647, %v577
    %vm594 = vcmp.lt.f32.partialorder %v593, 0.0004427343
    %v595 = vsel %vm594, %v592, %v589
    %v596 = vadd.f32 %v566, %v586
    %v597 = vadd.f32 %v567, %v595
    %v598 = vsub.f32 0.0, %v502
    %v599 = vsub.f32 0.0, %v503
    %v600 = vadd.f32 %v598, %v536
    %v601 = vadd.f32 %v599, %v537
    %v602 = vsub.f32 0.0, %v506
    %v603 = vsub.f32 0.0, %v507
    %v604 = vadd.f32 %v602, %v566
    %v605 = vadd.f32 %v603, %v567
    %v606 = vsub.f32 %v604, %v600
    %v607 = vsub.f32 %v605, %v601
    %v608 = vmul.f32 %v606, 1.442695
    %v609 = vpow.pop %v608
    %v610 = vmul.f32 %v607, 1.442695
    %v611 = vpow.pop %v610
    %v612 = vsub.f32 0.0, %v609
    %v613 = vsub.f32 0.0, %v611
    %v614 = vadd.f32 %v612, 1e-06
    %v615 = vadd.f32 %v613, 1e-06
    %v616 = vadd.f32 %v614, 1.0
    %v617 = vlog2.pop %v616
    %v618 = vmul.f32 %v617, 0.6931472
    %v619 = vmul.f32 -0.5, %v614
    %v620 = vadd.f32 %v619, 1.0
    %v621 = vmul.f32 %v620, %v614
    %v622 = vand.u32 2147483647, %v614
    %vm623 = vcmp.lt.f32.partialorder %v622, 0.0004427343
    %v624 = vsel %vm623, %v621, %v618
    %v625 = vadd.f32 %v615, 1.0
    %v626 = vlog2.pop %v625
    %v627 = vmul.f32 %v626, 0.6931472
    %v628 = vmul.f32 -0.5, %v615
    %v629 = vadd.f32 %v628, 1.0
    %v630 = vmul.f32 %v629, %v615
    %v631 = vand.u32 2147483647, %v615
    %vm632 = vcmp.lt.f32.partialorder %v631, 0.0004427343
    %v633 = vsel %vm632, %v630, %v627
    %v634 = vadd.f32 %v600, %v624
    %v635 = vadd.f32 %v601, %v633
    %v636 = vmin.f32 %v596, %v634
    %v637 = vmin.f32 %v597, %v635
    %s638 = scalar_lea.vmem [#allocation7], 32
    %639 = vst [vmem:[%s638] sm:$0xff] %v636
    %640 = vst [vmem:[%s638 + $0x8] sm:$0xff] %v637
    %s641 = scalar_lea.vmem %s0, 8
    %v642 = vld [vmem:[%s641] ss:$4 sm:$0x3]
    %s643 = scalar_lea.vmem %s641, 1
    %v644 = vld [vmem:[%s643] ss:$4 sm:$0x3]
    %s645 = scalar_lea.vmem %s641, 2
    %v646 = vld [vmem:[%s645] ss:$4 sm:$0x3]
    %s647 = sld [smem:[#allocation5 + $0x80]]
    %v648 = vstv %s647
    %v649 = vadd.f32 %v648, 0.0
    %s650 = sld [smem:[#allocation5 + $0x83]]
    %v651 = vstv %s650
    %v652 = vadd.f32 %v651, 0.0
    %s653 = sld [smem:[#allocation2]]
    %v654 = vstv %s653
    %v655 = vmul.f32 %v642, %v654
    %v656 = vadd.f32 %v649, %v655
    %s657 = sld [smem:[#allocation2 + $0x3]]
    %v658 = vstv %s657
    %v659 = vmul.f32 %v642, %v658
    %v660 = vadd.f32 %v652, %v659
    %s661 = sld [smem:[#allocation2 + $0x80]]
    %v662 = vstv %s661
    %v663 = vmul.f32 %v644, %v662
    %v664 = vadd.f32 %v656, %v663
    %s665 = sld [smem:[#allocation2 + $0x83]]
    %v666 = vstv %s665
    %v667 = vmul.f32 %v644, %v666
    %v668 = vadd.f32 %v660, %v667
    %s669 = sld [smem:[#allocation2 + $0x100]]
    %v670 = vstv %s669
    %v671 = vmul.f32 %v646, %v670
    %v672 = vadd.f32 %v664, %v671
    %s673 = sld [smem:[#allocation2 + $0x103]]
    %v674 = vstv %s673
    %v675 = vmul.f32 %v646, %v674
    %v676 = vadd.f32 %v668, %v675
    %v677 = vsub.f32 %v676, 2.0
    %v678 = vsub.f32 0.0, %v677
    %v679 = vmul.f32 %v678, 1.442695
    %v680 = vpow.pop %v679
    %v682 = vlaneseq
    %v683 = vshrl.u32 %v682, 7
    %v684 = vsub.s32 0, %v683
    %v685 = vrot.slane %v672, %v684
    %v686 = vlaneseq
    %v687 = vshrl.u32 %v686, 7
    %v688 = vsub.s32 1, %v687
    %v689 = vrot.slane %v672, %v688
    %v692 = vsub.f32 %v44, %v685
    %v693 = vsub.f32 %v44, %v689
    %v695 = vlaneseq
    %v696 = vshrl.u32 %v695, 7
    %v697 = vsub.s32 0, %v696
    %v698 = vrot.slane %v680, %v697
    %v699 = vlaneseq
    %v700 = vshrl.u32 %v699, 7
    %v701 = vsub.s32 1, %v700
    %v702 = vrot.slane %v680, %v701
    %v705 = vmul.f32 %v692, %v698
    %v706 = vmul.f32 %v693, %v702
    %v707 = vsub.f32 %v45, %v685
    %v708 = vsub.f32 %v45, %v689
    %v709 = vmul.f32 %v707, %v698
    %v710 = vmul.f32 %v708, %v702
    %v711 = vmin.f32 %v705, 0.0
    %v712 = vmin.f32 %v706, 0.0
    %v713 = vand.u32 2147483647, %v705
    %v714 = vand.u32 2147483647, %v706
    %v715 = vsub.f32 0.0, %v713
    %v716 = vsub.f32 0.0, %v714
    %v717 = vmul.f32 %v715, 1.442695
    %v718 = vpow.pop %v717
    %v719 = vmul.f32 %v716, 1.442695
    %v720 = vpow.pop %v719
    %v721 = vadd.f32 %v718, 1.0
    %v722 = vlog2.pop %v721
    %v723 = vmul.f32 %v722, 0.6931472
    %v724 = vmul.f32 -0.5, %v718
    %v725 = vadd.f32 %v724, 1.0
    %v726 = vmul.f32 %v725, %v718
    %v727 = vand.u32 2147483647, %v718
    %vm728 = vcmp.lt.f32.partialorder %v727, 0.0004427343
    %v729 = vsel %vm728, %v726, %v723
    %v730 = vadd.f32 %v720, 1.0
    %v731 = vlog2.pop %v730
    %v732 = vmul.f32 %v731, 0.6931472
    %v733 = vmul.f32 -0.5, %v720
    %v734 = vadd.f32 %v733, 1.0
    %v735 = vmul.f32 %v734, %v720
    %v736 = vand.u32 2147483647, %v720
    %vm737 = vcmp.lt.f32.partialorder %v736, 0.0004427343
    %v738 = vsel %vm737, %v735, %v732
    %v739 = vsub.f32 %v711, %v729
    %v740 = vsub.f32 %v712, %v738
    %v741 = vmin.f32 %v709, 0.0
    %v742 = vmin.f32 %v710, 0.0
    %v743 = vand.u32 2147483647, %v709
    %v744 = vand.u32 2147483647, %v710
    %v745 = vsub.f32 0.0, %v743
    %v746 = vsub.f32 0.0, %v744
    %v747 = vmul.f32 %v745, 1.442695
    %v748 = vpow.pop %v747
    %v749 = vmul.f32 %v746, 1.442695
    %v750 = vpow.pop %v749
    %v751 = vadd.f32 %v748, 1.0
    %v752 = vlog2.pop %v751
    %v753 = vmul.f32 %v752, 0.6931472
    %v754 = vmul.f32 -0.5, %v748
    %v755 = vadd.f32 %v754, 1.0
    %v756 = vmul.f32 %v755, %v748
    %v757 = vand.u32 2147483647, %v748
    %vm758 = vcmp.lt.f32.partialorder %v757, 0.0004427343
    %v759 = vsel %vm758, %v756, %v753
    %v760 = vadd.f32 %v750, 1.0
    %v761 = vlog2.pop %v760
    %v762 = vmul.f32 %v761, 0.6931472
    %v763 = vmul.f32 -0.5, %v750
    %v764 = vadd.f32 %v763, 1.0
    %v765 = vmul.f32 %v764, %v750
    %v766 = vand.u32 2147483647, %v750
    %vm767 = vcmp.lt.f32.partialorder %v766, 0.0004427343
    %v768 = vsel %vm767, %v765, %v762
    %v769 = vsub.f32 %v741, %v759
    %v770 = vsub.f32 %v742, %v768
    %v771 = vsub.f32 %v739, %v769
    %v772 = vsub.f32 %v740, %v770
    %v773 = vmul.f32 %v771, 1.442695
    %v774 = vpow.pop %v773
    %v775 = vmul.f32 %v772, 1.442695
    %v776 = vpow.pop %v775
    %v777 = vsub.f32 0.0, %v774
    %v778 = vsub.f32 0.0, %v776
    %v779 = vadd.f32 %v777, 1e-06
    %v780 = vadd.f32 %v778, 1e-06
    %v781 = vadd.f32 %v779, 1.0
    %v782 = vlog2.pop %v781
    %v783 = vmul.f32 %v782, 0.6931472
    %v784 = vmul.f32 -0.5, %v779
    %v785 = vadd.f32 %v784, 1.0
    %v786 = vmul.f32 %v785, %v779
    %v787 = vand.u32 2147483647, %v779
    %vm788 = vcmp.lt.f32.partialorder %v787, 0.0004427343
    %v789 = vsel %vm788, %v786, %v783
    %v790 = vadd.f32 %v780, 1.0
    %v791 = vlog2.pop %v790
    %v792 = vmul.f32 %v791, 0.6931472
    %v793 = vmul.f32 -0.5, %v780
    %v794 = vadd.f32 %v793, 1.0
    %v795 = vmul.f32 %v794, %v780
    %v796 = vand.u32 2147483647, %v780
    %vm797 = vcmp.lt.f32.partialorder %v796, 0.0004427343
    %v798 = vsel %vm797, %v795, %v792
    %v799 = vadd.f32 %v769, %v789
    %v800 = vadd.f32 %v770, %v798
    %v801 = vsub.f32 0.0, %v705
    %v802 = vsub.f32 0.0, %v706
    %v803 = vadd.f32 %v801, %v739
    %v804 = vadd.f32 %v802, %v740
    %v805 = vsub.f32 0.0, %v709
    %v806 = vsub.f32 0.0, %v710
    %v807 = vadd.f32 %v805, %v769
    %v808 = vadd.f32 %v806, %v770
    %v809 = vsub.f32 %v807, %v803
    %v810 = vsub.f32 %v808, %v804
    %v811 = vmul.f32 %v809, 1.442695
    %v812 = vpow.pop %v811
    %v813 = vmul.f32 %v810, 1.442695
    %v814 = vpow.pop %v813
    %v815 = vsub.f32 0.0, %v812
    %v816 = vsub.f32 0.0, %v814
    %v817 = vadd.f32 %v815, 1e-06
    %v818 = vadd.f32 %v816, 1e-06
    %v819 = vadd.f32 %v817, 1.0
    %v820 = vlog2.pop %v819
    %v821 = vmul.f32 %v820, 0.6931472
    %v822 = vmul.f32 -0.5, %v817
    %v823 = vadd.f32 %v822, 1.0
    %v824 = vmul.f32 %v823, %v817
    %v825 = vand.u32 2147483647, %v817
    %vm826 = vcmp.lt.f32.partialorder %v825, 0.0004427343
    %v827 = vsel %vm826, %v824, %v821
    %v828 = vadd.f32 %v818, 1.0
    %v829 = vlog2.pop %v828
    %v830 = vmul.f32 %v829, 0.6931472
    %v831 = vmul.f32 -0.5, %v818
    %v832 = vadd.f32 %v831, 1.0
    %v833 = vmul.f32 %v832, %v818
    %v834 = vand.u32 2147483647, %v818
    %vm835 = vcmp.lt.f32.partialorder %v834, 0.0004427343
    %v836 = vsel %vm835, %v833, %v830
    %v837 = vadd.f32 %v803, %v827
    %v838 = vadd.f32 %v804, %v836
    %v839 = vmin.f32 %v799, %v837
    %v840 = vmin.f32 %v800, %v838
    %s841 = scalar_lea.vmem [#allocation7], 48
    %842 = vst [vmem:[%s841] sm:$0xff] %v839
    %843 = vst [vmem:[%s841 + $0x8] sm:$0xff] %v840
    %s844 = sld [smem:[#allocation5 + $0x81]]
    %v845 = vstv %s844
    %v846 = vadd.f32 %v845, 0.0
    %s847 = sld [smem:[#allocation5 + $0x84]]
    %v848 = vstv %s847
    %v849 = vadd.f32 %v848, 0.0
    %s850 = sld [smem:[#allocation2 + $0x1]]
    %v851 = vstv %s850
    %v852 = vmul.f32 %v642, %v851
    %v853 = vadd.f32 %v846, %v852
    %s854 = sld [smem:[#allocation2 + $0x4]]
    %v855 = vstv %s854
    %v856 = vmul.f32 %v642, %v855
    %v857 = vadd.f32 %v849, %v856
    %s858 = sld [smem:[#allocation2 + $0x81]]
    %v859 = vstv %s858
    %v860 = vmul.f32 %v644, %v859
    %v861 = vadd.f32 %v853, %v860
    %s862 = sld [smem:[#allocation2 + $0x84]]
    %v863 = vstv %s862
    %v864 = vmul.f32 %v644, %v863
    %v865 = vadd.f32 %v857, %v864
    %s866 = sld [smem:[#allocation2 + $0x101]]
    %v867 = vstv %s866
    %v868 = vmul.f32 %v646, %v867
    %v869 = vadd.f32 %v861, %v868
    %s870 = sld [smem:[#allocation2 + $0x104]]
    %v871 = vstv %s870
    %v872 = vmul.f32 %v646, %v871
    %v873 = vadd.f32 %v865, %v872
    %v874 = vsub.f32 %v873, 2.0
    %v875 = vsub.f32 0.0, %v874
    %v876 = vmul.f32 %v875, 1.442695
    %v877 = vpow.pop %v876
    %v879 = vlaneseq
    %v880 = vshrl.u32 %v879, 7
    %v881 = vsub.s32 0, %v880
    %v882 = vrot.slane %v869, %v881
    %v883 = vlaneseq
    %v884 = vshrl.u32 %v883, 7
    %v885 = vsub.s32 1, %v884
    %v886 = vrot.slane %v869, %v885
    %v889 = vsub.f32 %v44, %v882
    %v890 = vsub.f32 %v44, %v886
    %v892 = vlaneseq
    %v893 = vshrl.u32 %v892, 7
    %v894 = vsub.s32 0, %v893
    %v895 = vrot.slane %v877, %v894
    %v896 = vlaneseq
    %v897 = vshrl.u32 %v896, 7
    %v898 = vsub.s32 1, %v897
    %v899 = vrot.slane %v877, %v898
    %v902 = vmul.f32 %v889, %v895
    %v903 = vmul.f32 %v890, %v899
    %v904 = vsub.f32 %v45, %v882
    %v905 = vsub.f32 %v45, %v886
    %v906 = vmul.f32 %v904, %v895
    %v907 = vmul.f32 %v905, %v899
    %v908 = vmin.f32 %v902, 0.0
    %v909 = vmin.f32 %v903, 0.0
    %v910 = vand.u32 2147483647, %v902
    %v911 = vand.u32 2147483647, %v903
    %v912 = vsub.f32 0.0, %v910
    %v913 = vsub.f32 0.0, %v911
    %v914 = vmul.f32 %v912, 1.442695
    %v915 = vpow.pop %v914
    %v916 = vmul.f32 %v913, 1.442695
    %v917 = vpow.pop %v916
    %v918 = vadd.f32 %v915, 1.0
    %v919 = vlog2.pop %v918
    %v920 = vmul.f32 %v919, 0.6931472
    %v921 = vmul.f32 -0.5, %v915
    %v922 = vadd.f32 %v921, 1.0
    %v923 = vmul.f32 %v922, %v915
    %v924 = vand.u32 2147483647, %v915
    %vm925 = vcmp.lt.f32.partialorder %v924, 0.0004427343
    %v926 = vsel %vm925, %v923, %v920
    %v927 = vadd.f32 %v917, 1.0
    %v928 = vlog2.pop %v927
    %v929 = vmul.f32 %v928, 0.6931472
    %v930 = vmul.f32 -0.5, %v917
    %v931 = vadd.f32 %v930, 1.0
    %v932 = vmul.f32 %v931, %v917
    %v933 = vand.u32 2147483647, %v917
    %vm934 = vcmp.lt.f32.partialorder %v933, 0.0004427343
    %v935 = vsel %vm934, %v932, %v929
    %v936 = vsub.f32 %v908, %v926
    %v937 = vsub.f32 %v909, %v935
    %v938 = vmin.f32 %v906, 0.0
    %v939 = vmin.f32 %v907, 0.0
    %v940 = vand.u32 2147483647, %v906
    %v941 = vand.u32 2147483647, %v907
    %v942 = vsub.f32 0.0, %v940
    %v943 = vsub.f32 0.0, %v941
    %v944 = vmul.f32 %v942, 1.442695
    %v945 = vpow.pop %v944
    %v946 = vmul.f32 %v943, 1.442695
    %v947 = vpow.pop %v946
    %v948 = vadd.f32 %v945, 1.0
    %v949 = vlog2.pop %v948
    %v950 = vmul.f32 %v949, 0.6931472
    %v951 = vmul.f32 -0.5, %v945
    %v952 = vadd.f32 %v951, 1.0
    %v953 = vmul.f32 %v952, %v945
    %v954 = vand.u32 2147483647, %v945
    %vm955 = vcmp.lt.f32.partialorder %v954, 0.0004427343
    %v956 = vsel %vm955, %v953, %v950
    %v957 = vadd.f32 %v947, 1.0
    %v958 = vlog2.pop %v957
    %v959 = vmul.f32 %v958, 0.6931472
    %v960 = vmul.f32 -0.5, %v947
    %v961 = vadd.f32 %v960, 1.0
    %v962 = vmul.f32 %v961, %v947
    %v963 = vand.u32 2147483647, %v947
    %vm964 = vcmp.lt.f32.partialorder %v963, 0.0004427343
    %v965 = vsel %vm964, %v962, %v959
    %v966 = vsub.f32 %v938, %v956
    %v967 = vsub.f32 %v939, %v965
    %v968 = vsub.f32 %v936, %v966
    %v969 = vsub.f32 %v937, %v967
    %v970 = vmul.f32 %v968, 1.442695
    %v971 = vpow.pop %v970
    %v972 = vmul.f32 %v969, 1.442695
    %v973 = vpow.pop %v972
    %v974 = vsub.f32 0.0, %v971
    %v975 = vsub.f32 0.0, %v973
    %v976 = vadd.f32 %v974, 1e-06
    %v977 = vadd.f32 %v975, 1e-06
    %v978 = vadd.f32 %v976, 1.0
    %v979 = vlog2.pop %v978
    %v980 = vmul.f32 %v979, 0.6931472
    %v981 = vmul.f32 -0.5, %v976
    %v982 = vadd.f32 %v981, 1.0
    %v983 = vmul.f32 %v982, %v976
    %v984 = vand.u32 2147483647, %v976
    %vm985 = vcmp.lt.f32.partialorder %v984, 0.0004427343
    %v986 = vsel %vm985, %v983, %v980
    %v987 = vadd.f32 %v977, 1.0
    %v988 = vlog2.pop %v987
    %v989 = vmul.f32 %v988, 0.6931472
    %v990 = vmul.f32 -0.5, %v977
    %v991 = vadd.f32 %v990, 1.0
    %v992 = vmul.f32 %v991, %v977
    %v993 = vand.u32 2147483647, %v977
    %vm994 = vcmp.lt.f32.partialorder %v993, 0.0004427343
    %v995 = vsel %vm994, %v992, %v989
    %v996 = vadd.f32 %v966, %v986
    %v997 = vadd.f32 %v967, %v995
    %v998 = vsub.f32 0.0, %v902
    %v999 = vsub.f32 0.0, %v903
    %v1000 = vadd.f32 %v998, %v936
    %v1001 = vadd.f32 %v999, %v937
    %v1002 = vsub.f32 0.0, %v906
    %v1003 = vsub.f32 0.0, %v907
    %v1004 = vadd.f32 %v1002, %v966
    %v1005 = vadd.f32 %v1003, %v967
    %v1006 = vsub.f32 %v1004, %v1000
    %v1007 = vsub.f32 %v1005, %v1001
    %v1008 = vmul.f32 %v1006, 1.442695
    %v1009 = vpow.pop %v1008
    %v1010 = vmul.f32 %v1007, 1.442695
    %v1011 = vpow.pop %v1010
    %v1012 = vsub.f32 0.0, %v1009
    %v1013 = vsub.f32 0.0, %v1011
    %v1014 = vadd.f32 %v1012, 1e-06
    %v1015 = vadd.f32 %v1013, 1e-06
    %v1016 = vadd.f32 %v1014, 1.0
    %v1017 = vlog2.pop %v1016
    %v1018 = vmul.f32 %v1017, 0.6931472
    %v1019 = vmul.f32 -0.5, %v1014
    %v1020 = vadd.f32 %v1019, 1.0
    %v1021 = vmul.f32 %v1020, %v1014
    %v1022 = vand.u32 2147483647, %v1014
    %vm1023 = vcmp.lt.f32.partialorder %v1022, 0.0004427343
    %v1024 = vsel %vm1023, %v1021, %v1018
    %v1025 = vadd.f32 %v1015, 1.0
    %v1026 = vlog2.pop %v1025
    %v1027 = vmul.f32 %v1026, 0.6931472
    %v1028 = vmul.f32 -0.5, %v1015
    %v1029 = vadd.f32 %v1028, 1.0
    %v1030 = vmul.f32 %v1029, %v1015
    %v1031 = vand.u32 2147483647, %v1015
    %vm1032 = vcmp.lt.f32.partialorder %v1031, 0.0004427343
    %v1033 = vsel %vm1032, %v1030, %v1027
    %v1034 = vadd.f32 %v1000, %v1024
    %v1035 = vadd.f32 %v1001, %v1033
    %v1036 = vmin.f32 %v996, %v1034
    %v1037 = vmin.f32 %v997, %v1035
    %s1038 = scalar_lea.vmem [#allocation7], 64
    %1039 = vst [vmem:[%s1038] sm:$0xff] %v1036
    %1040 = vst [vmem:[%s1038 + $0x8] sm:$0xff] %v1037
    %s1041 = sld [smem:[#allocation5 + $0x82]]
    %v1042 = vstv %s1041
    %v1043 = vadd.f32 %v1042, 0.0
    %s1044 = sld [smem:[#allocation5 + $0x85]]
    %v1045 = vstv %s1044
    %v1046 = vadd.f32 %v1045, 0.0
    %s1047 = sld [smem:[#allocation2 + $0x2]]
    %v1048 = vstv %s1047
    %v1049 = vmul.f32 %v642, %v1048
    %v1050 = vadd.f32 %v1043, %v1049
    %s1051 = sld [smem:[#allocation2 + $0x5]]
    %v1052 = vstv %s1051
    %v1053 = vmul.f32 %v642, %v1052
    %v1054 = vadd.f32 %v1046, %v1053
    %s1055 = sld [smem:[#allocation2 + $0x82]]
    %v1056 = vstv %s1055
    %v1057 = vmul.f32 %v644, %v1056
    %v1058 = vadd.f32 %v1050, %v1057
    %s1059 = sld [smem:[#allocation2 + $0x85]]
    %v1060 = vstv %s1059
    %v1061 = vmul.f32 %v644, %v1060
    %v1062 = vadd.f32 %v1054, %v1061
    %s1063 = sld [smem:[#allocation2 + $0x102]]
    %v1064 = vstv %s1063
    %v1065 = vmul.f32 %v646, %v1064
    %v1066 = vadd.f32 %v1058, %v1065
    %s1067 = sld [smem:[#allocation2 + $0x105]]
    %v1068 = vstv %s1067
    %v1069 = vmul.f32 %v646, %v1068
    %v1070 = vadd.f32 %v1062, %v1069
    %v1071 = vsub.f32 %v1070, 2.0
    %v1072 = vsub.f32 0.0, %v1071
    %v1073 = vmul.f32 %v1072, 1.442695
    %v1074 = vpow.pop %v1073
    %v1076 = vlaneseq
    %v1077 = vshrl.u32 %v1076, 7
    %v1078 = vsub.s32 0, %v1077
    %v1079 = vrot.slane %v1066, %v1078
    %v1080 = vlaneseq
    %v1081 = vshrl.u32 %v1080, 7
    %v1082 = vsub.s32 1, %v1081
    %v1083 = vrot.slane %v1066, %v1082
    %v1086 = vsub.f32 %v44, %v1079
    %v1087 = vsub.f32 %v44, %v1083
    %v1089 = vlaneseq
    %v1090 = vshrl.u32 %v1089, 7
    %v1091 = vsub.s32 0, %v1090
    %v1092 = vrot.slane %v1074, %v1091
    %v1093 = vlaneseq
    %v1094 = vshrl.u32 %v1093, 7
    %v1095 = vsub.s32 1, %v1094
    %v1096 = vrot.slane %v1074, %v1095
    %v1099 = vmul.f32 %v1086, %v1092
    %v1100 = vmul.f32 %v1087, %v1096
    %v1101 = vsub.f32 %v45, %v1079
    %v1102 = vsub.f32 %v45, %v1083
    %v1103 = vmul.f32 %v1101, %v1092
    %v1104 = vmul.f32 %v1102, %v1096
    %v1105 = vmin.f32 %v1099, 0.0
    %v1106 = vmin.f32 %v1100, 0.0
    %v1107 = vand.u32 2147483647, %v1099
    %v1108 = vand.u32 2147483647, %v1100
    %v1109 = vsub.f32 0.0, %v1107
    %v1110 = vsub.f32 0.0, %v1108
    %v1111 = vmul.f32 %v1109, 1.442695
    %v1112 = vpow.pop %v1111
    %v1113 = vmul.f32 %v1110, 1.442695
    %v1114 = vpow.pop %v1113
    %v1115 = vadd.f32 %v1112, 1.0
    %v1116 = vlog2.pop %v1115
    %v1117 = vmul.f32 %v1116, 0.6931472
    %v1118 = vmul.f32 -0.5, %v1112
    %v1119 = vadd.f32 %v1118, 1.0
    %v1120 = vmul.f32 %v1119, %v1112
    %v1121 = vand.u32 2147483647, %v1112
    %vm1122 = vcmp.lt.f32.partialorder %v1121, 0.0004427343
    %v1123 = vsel %vm1122, %v1120, %v1117
    %v1124 = vadd.f32 %v1114, 1.0
    %v1125 = vlog2.pop %v1124
    %v1126 = vmul.f32 %v1125, 0.6931472
    %v1127 = vmul.f32 -0.5, %v1114
    %v1128 = vadd.f32 %v1127, 1.0
    %v1129 = vmul.f32 %v1128, %v1114
    %v1130 = vand.u32 2147483647, %v1114
    %vm1131 = vcmp.lt.f32.partialorder %v1130, 0.0004427343
    %v1132 = vsel %vm1131, %v1129, %v1126
    %v1133 = vsub.f32 %v1105, %v1123
    %v1134 = vsub.f32 %v1106, %v1132
    %v1135 = vmin.f32 %v1103, 0.0
    %v1136 = vmin.f32 %v1104, 0.0
    %v1137 = vand.u32 2147483647, %v1103
    %v1138 = vand.u32 2147483647, %v1104
    %v1139 = vsub.f32 0.0, %v1137
    %v1140 = vsub.f32 0.0, %v1138
    %v1141 = vmul.f32 %v1139, 1.442695
    %v1142 = vpow.pop %v1141
    %v1143 = vmul.f32 %v1140, 1.442695
    %v1144 = vpow.pop %v1143
    %v1145 = vadd.f32 %v1142, 1.0
    %v1146 = vlog2.pop %v1145
    %v1147 = vmul.f32 %v1146, 0.6931472
    %v1148 = vmul.f32 -0.5, %v1142
    %v1149 = vadd.f32 %v1148, 1.0
    %v1150 = vmul.f32 %v1149, %v1142
    %v1151 = vand.u32 2147483647, %v1142
    %vm1152 = vcmp.lt.f32.partialorder %v1151, 0.0004427343
    %v1153 = vsel %vm1152, %v1150, %v1147
    %v1154 = vadd.f32 %v1144, 1.0
    %v1155 = vlog2.pop %v1154
    %v1156 = vmul.f32 %v1155, 0.6931472
    %v1157 = vmul.f32 -0.5, %v1144
    %v1158 = vadd.f32 %v1157, 1.0
    %v1159 = vmul.f32 %v1158, %v1144
    %v1160 = vand.u32 2147483647, %v1144
    %vm1161 = vcmp.lt.f32.partialorder %v1160, 0.0004427343
    %v1162 = vsel %vm1161, %v1159, %v1156
    %v1163 = vsub.f32 %v1135, %v1153
    %v1164 = vsub.f32 %v1136, %v1162
    %v1165 = vsub.f32 %v1133, %v1163
    %v1166 = vsub.f32 %v1134, %v1164
    %v1167 = vmul.f32 %v1165, 1.442695
    %v1168 = vpow.pop %v1167
    %v1169 = vmul.f32 %v1166, 1.442695
    %v1170 = vpow.pop %v1169
    %v1171 = vsub.f32 0.0, %v1168
    %v1172 = vsub.f32 0.0, %v1170
    %v1173 = vadd.f32 %v1171, 1e-06
    %v1174 = vadd.f32 %v1172, 1e-06
    %v1175 = vadd.f32 %v1173, 1.0
    %v1176 = vlog2.pop %v1175
    %v1177 = vmul.f32 %v1176, 0.6931472
    %v1178 = vmul.f32 -0.5, %v1173
    %v1179 = vadd.f32 %v1178, 1.0
    %v1180 = vmul.f32 %v1179, %v1173
    %v1181 = vand.u32 2147483647, %v1173
    %vm1182 = vcmp.lt.f32.partialorder %v1181, 0.0004427343
    %v1183 = vsel %vm1182, %v1180, %v1177
    %v1184 = vadd.f32 %v1174, 1.0
    %v1185 = vlog2.pop %v1184
    %v1186 = vmul.f32 %v1185, 0.6931472
    %v1187 = vmul.f32 -0.5, %v1174
    %v1188 = vadd.f32 %v1187, 1.0
    %v1189 = vmul.f32 %v1188, %v1174
    %v1190 = vand.u32 2147483647, %v1174
    %vm1191 = vcmp.lt.f32.partialorder %v1190, 0.0004427343
    %v1192 = vsel %vm1191, %v1189, %v1186
    %v1193 = vadd.f32 %v1163, %v1183
    %v1194 = vadd.f32 %v1164, %v1192
    %v1195 = vsub.f32 0.0, %v1099
    %v1196 = vsub.f32 0.0, %v1100
    %v1197 = vadd.f32 %v1195, %v1133
    %v1198 = vadd.f32 %v1196, %v1134
    %v1199 = vsub.f32 0.0, %v1103
    %v1200 = vsub.f32 0.0, %v1104
    %v1201 = vadd.f32 %v1199, %v1163
    %v1202 = vadd.f32 %v1200, %v1164
    %v1203 = vsub.f32 %v1201, %v1197
    %v1204 = vsub.f32 %v1202, %v1198
    %v1205 = vmul.f32 %v1203, 1.442695
    %v1206 = vpow.pop %v1205
    %v1207 = vmul.f32 %v1204, 1.442695
    %v1208 = vpow.pop %v1207
    %v1209 = vsub.f32 0.0, %v1206
    %v1210 = vsub.f32 0.0, %v1208
    %v1211 = vadd.f32 %v1209, 1e-06
    %v1212 = vadd.f32 %v1210, 1e-06
    %v1213 = vadd.f32 %v1211, 1.0
    %v1214 = vlog2.pop %v1213
    %v1215 = vmul.f32 %v1214, 0.6931472
    %v1216 = vmul.f32 -0.5, %v1211
    %v1217 = vadd.f32 %v1216, 1.0
    %v1218 = vmul.f32 %v1217, %v1211
    %v1219 = vand.u32 2147483647, %v1211
    %vm1220 = vcmp.lt.f32.partialorder %v1219, 0.0004427343
    %v1221 = vsel %vm1220, %v1218, %v1215
    %v1222 = vadd.f32 %v1212, 1.0
    %v1223 = vlog2.pop %v1222
    %v1224 = vmul.f32 %v1223, 0.6931472
    %v1225 = vmul.f32 -0.5, %v1212
    %v1226 = vadd.f32 %v1225, 1.0
    %v1227 = vmul.f32 %v1226, %v1212
    %v1228 = vand.u32 2147483647, %v1212
    %vm1229 = vcmp.lt.f32.partialorder %v1228, 0.0004427343
    %v1230 = vsel %vm1229, %v1227, %v1224
    %v1231 = vadd.f32 %v1197, %v1221
    %v1232 = vadd.f32 %v1198, %v1230
    %v1233 = vmin.f32 %v1193, %v1231
    %v1234 = vmin.f32 %v1194, %v1232
    %s1235 = scalar_lea.vmem [#allocation7], 80
    %1236 = vst [vmem:[%s1235] sm:$0xff] %v1233
    %1237 = vst [vmem:[%s1235 + $0x8] sm:$0xff] %v1234
    // Predicated region
    $region22: #{image_x0_pred_forward.1} parent=1 // pred_check
      _
    $region23: #{image_x0_pred_forward.1} parent=1 // pred_check_branch
      %1239 = sbr.rel (0) target = $region25
    $region24: #{image_x0_pred_forward.1} parent=1 // pred_region
      %s1241 = ssub.s32 1536, 1536
      %1242 = vsyncadd [#allocation3], %s1241
      %s1243 = sshll.u32 [#allocation7], 4
      %s1244 = int_to_ptr.vmem [resolvable:$true] %s1243
      %1249 = dma.vmem_to_hbm [thread:$0]  %s1244, 1536, %s3, [#allocation3], 256, 256, 16
    $region25: #{image_x0_pred_forward.1} parent=1 // pred_fallthru
      _
    // Predicated region
    $region26: #{image_x0_pred_forward.1} parent=1 // pred_check
      _
    $region27: #{image_x0_pred_forward.1} parent=1 // pred_check_branch
      %1251 = sbr.rel (0) target = $region29
    $region28: #{image_x0_pred_forward.1} parent=1 // pred_region
      %1252 = dma.done [#allocation3], 1536
    $region29: #{image_x0_pred_forward.1} parent=1 // pred_fallthru
      _
    %1253 = vsyncpa [#allocation3], 1
    %1254 = vsyncpa [#allocation4], 1
    %1255 = vsyncpa [#allocation6], 1

</llo_original>
